<compile_context>
chip_gen: v7x
topology: tpu7x:2x2x1
jax: 0.10.0
libtpu: 0.0.40
codegen_flags: <defaults>
</compile_context>

<pallas_src>
import functools

import jax
import jax.numpy as jnp
from jax import lax
from jax.experimental import pallas as pl
from jax.experimental.pallas import tpu as pltpu

LANES = 128
ROW_CHUNK = 256            # packed rows per inner-loop step (register-pressure cap)
MAX_TILE_ROWS = 4096       # packed rows per grid step; ~6 MiB double-buffered I/O


def _round_up(n, m):
    return ((n + m - 1) // m) * m


def _sdae_kernel(x_ref,
                 w1_ref, b1_ref,
                 w2_ref, b2_ref,
                 w3_ref, b3_ref,
                 w4_ref, b4_ref,
                 out_ref, *, compute_dtype):
    """Fused encoder+decoder on one lane-dense batch tile.

    x_ref (f32) / out_ref (bf16) hold a (tile_rows, packed_dim) lane-dense view in
    which each row carries `pack` consecutive batch rows; w*/b* are the matching
    block-diagonal (kron) / tiled expansions, so the chain is plain matmul + bias
    + ReLU with no in-kernel reshapes.  The tile is processed in ROW_CHUNK-row
    sub-chunks so f32 intermediates stay near the vreg file.
    """
    tile_rows = x_ref.shape[0]
    n_full = tile_rows // ROW_CHUNK
    rem = tile_rows % ROW_CHUNK

    def compute_chunk(r0, nrows):
        # Cast to bf16 inside the kernel (no wrapper-side astype HBM pass).
        x = x_ref[pl.ds(r0, nrows), :].astype(compute_dtype)

        # Encoder: Linear -> ReLU -> Linear (f32 MXU accumulation, f32 bias/ReLU).
        h1 = jnp.dot(x, w1_ref[...],
                     preferred_element_type=jnp.float32) + b1_ref[...]
        h1 = jnp.maximum(h1, 0.0)
        enc = jnp.dot(h1.astype(compute_dtype), w2_ref[...],
                      preferred_element_type=jnp.float32) + b2_ref[...]

        # Decoder: Linear -> ReLU -> Linear.
        h2 = jnp.dot(enc.astype(compute_dtype), w3_ref[...],
                     preferred_element_type=jnp.float32) + b3_ref[...]
        h2 = jnp.maximum(h2, 0.0)
        dec = jnp.dot(h2.astype(compute_dtype), w4_ref[...],
                      preferred_element_type=jnp.float32) + b4_ref[...]

        out_ref[pl.ds(r0, nrows), :] = dec.astype(out_ref.dtype)

    if n_full > 0:
        def body(c, carry):
            compute_chunk(pl.multiple_of(c * ROW_CHUNK, ROW_CHUNK), ROW_CHUNK)
            return carry
        lax.fori_loop(0, n_full, body, 0, unroll=True)
    if rem > 0:
        compute_chunk(n_full * ROW_CHUNK, rem)


def pack_params(params, compute_dtype=jnp.bfloat16):
    """Block-diagonal (kron) expansion so `pack` batch rows share one lane row.

    Hoisted out of the per-call path: call once per model, reuse every forward.
    """
    D = params["w1"].shape[0]
    pack = LANES // D if (D <= LANES and LANES % D == 0) else 1
    # TODO(synk): add a padded-lane path (pad D up to a divisor of 128) instead of
    # the lane-sparse pack=1 fallback when input_dim does not divide 128.
    eye = jnp.eye(pack, dtype=jnp.float32)
    packed = {}
    for i in range(1, 5):
        packed[f"w{i}"] = jnp.kron(eye, params[f"w{i}"]).astype(compute_dtype)
        packed[f"b{i}"] = jnp.tile(params[f"b{i}"], (1, pack)).astype(jnp.float32)
    return packed


def sdae_forward(x, packed, *, tile_b=8192, out_dtype=jnp.bfloat16,
                 compute_dtype=jnp.bfloat16):
    """x: (B, input_dim) f32.  packed: output of pack_params.  Returns (B, input_dim)."""
    B, D = x.shape
    pack = packed["w1"].shape[0] // D
    packed_dim = pack * D

    # Tiny pad (< pack rows) only when B doesn't divide the packing factor, so the
    # lane-dense reshape stays a pure view of contiguous memory.
    b_round = _round_up(B, pack)
    if b_round != B:
        x = jnp.pad(x, ((0, b_round - B), (0, 0)))
    rows = b_round // pack
    x_dense = x.reshape(rows, packed_dim)

    # Packed-view tile rows: multiple of 8 (or == rows for tiny batches), capped
    # for v7x's VMEM; the partial last block is handled by Pallas (no batch pad).
    desired = max(8, min(tile_b // pack, MAX_TILE_ROWS))
    if rows <= 8:
        tile_rows = rows
    else:
        tile_rows = max(8, min((desired // 8) * 8, (rows // 8) * 8))
        if pl.cdiv(rows, tile_rows) < 2 and rows >= 16:
            # Give both v7x TensorCores work (harmless on 1-TC v5e/v6e).
            tile_rows = max(8, _round_up((rows + 1) // 2, 8))
    grid = (pl.cdiv(rows, tile_rows),)

    kernel = functools.partial(_sdae_kernel, compute_dtype=compute_dtype)

    def const_spec(a):
        return pl.BlockSpec(a.shape, lambda i: (0, 0))

    out_dense = pl.pallas_call(
        kernel,
        out_shape=jax.ShapeDtypeStruct((rows, packed_dim), out_dtype),
        grid=grid,
        in_specs=[
            pl.BlockSpec((tile_rows, packed_dim), lambda i: (i, 0)),
            const_spec(packed["w1"]), const_spec(packed["b1"]),
            const_spec(packed["w2"]), const_spec(packed["b2"]),
            const_spec(packed["w3"]), const_spec(packed["b3"]),
            const_spec(packed["w4"]), const_spec(packed["b4"]),
        ],
        out_specs=pl.BlockSpec((tile_rows, packed_dim), lambda i: (i, 0)),
        compiler_params=pltpu.CompilerParams(
            dimension_semantics=("parallel",),     # 2-TC sharding on v7x
            vmem_limit_bytes=32 * 1024 * 1024,     # fits v5e/v6e/v7x scoped VMEM
        ),
    )(x_dense,
      packed["w1"], packed["b1"], packed["w2"], packed["b2"],
      packed["w3"], packed["b3"], packed["w4"], packed["b4"])

    out = out_dense.reshape(b_round, D)
    return out[:B] if b_round != B else out


def init_params(key, input_dim):
    """Deterministic init mimicking nn.Linear's U(-1/sqrt(fan_in), 1/sqrt(fan_in))."""
    dims = [(input_dim, 10), (10, 16), (16, 10), (10, input_dim)]
    params = {}
    keys = jax.random.split(key, 2 * len(dims))
    for i, (fan_in, fan_out) in enumerate(dims):
        bound = 1.0 / jnp.sqrt(jnp.float32(fan_in))
        params[f"w{i + 1}"] = jax.random.uniform(
            keys[2 * i], (fan_in, fan_out), minval=-bound, maxval=bound,
            dtype=jnp.float32)
        params[f"b{i + 1}"] = jax.random.uniform(
            keys[2 * i + 1], (1, fan_out), minval=-bound, maxval=bound,
            dtype=jnp.float32)
    return params


def sdae_reference(x, params):
    """Pure-JAX f32 reference for correctness check."""
    h1 = jnp.maximum(x @ params["w1"] + params["b1"], 0.0)
    enc = h1 @ params["w2"] + params["b2"]
    h2 = jnp.maximum(enc @ params["w3"] + params["b3"], 0.0)
    return h2 @ params["w4"] + params["b4"]


if __name__ == "__main__":
    key = jax.random.PRNGKey(0)
    k_param, k_input = jax.random.split(key)

    B = 1000          # not a tile multiple -> exercises the partial-block path
    INPUT_DIM = 32

    params = init_params(k_param, INPUT_DIM)
    x = jax.random.normal(k_input, (B, INPUT_DIM), dtype=jnp.float32)

    packed = pack_params(params)           # hoisted: once per model, not per call
    fwd = jax.jit(sdae_forward)

    out = jax.block_until_ready(fwd(x, packed))
    assert out.shape == (B, INPUT_DIM)

    ref = sdae_reference(x, params)
    # bf16 inputs/weights/output on the MXU -> mixed-precision tolerance.
    rel_err = jnp.linalg.norm(out.astype(jnp.float32) - ref) / jnp.linalg.norm(ref)
    assert rel_err < 3e-2, f"relative error {rel_err} vs f32 reference too large"

    print("KERNEL_OK")
</pallas_src>

<mosaic_0001>
module attributes {stable_mosaic.version = 11 : i64} {
  func.func @_sdae_kernel(%arg0: i32, %arg1: memref<248x128xf32, #tpu.memory_space<vmem>>, %arg2: memref<128x40xbf16, #tpu.memory_space<vmem>>, %arg3: memref<1x40xf32, #tpu.memory_space<vmem>>, %arg4: memref<40x64xbf16, #tpu.memory_space<vmem>>, %arg5: memref<1x64xf32, #tpu.memory_space<vmem>>, %arg6: memref<64x40xbf16, #tpu.memory_space<vmem>>, %arg7: memref<1x40xf32, #tpu.memory_space<vmem>>, %arg8: memref<40x128xbf16, #tpu.memory_space<vmem>>, %arg9: memref<1x128xf32, #tpu.memory_space<vmem>>, %arg10: memref<248x128xbf16, #tpu.memory_space<vmem>>) attributes {dimension_semantics = [#tpu.dimension_semantics<parallel>], iteration_bounds = array<i64: 2>, scalar_prefetch = 0 : i64, scratch_operands = 0 : i64, tpu.core_type = #tpu.core_type<tc>, window_params = [{transform_indices = @transform_0, window_bounds = array<i64: 248, 128>}, {pipeline_mode = #tpu.pipeline_mode<synchronous>, transform_indices = @transform_1, window_bounds = array<i64: 128, 40>}, {pipeline_mode = #tpu.pipeline_mode<synchronous>, transform_indices = @transform_2, window_bounds = array<i64: 1, 40>}, {pipeline_mode = #tpu.pipeline_mode<synchronous>, transform_indices = @transform_3, window_bounds = array<i64: 40, 64>}, {pipeline_mode = #tpu.pipeline_mode<synchronous>, transform_indices = @transform_4, window_bounds = array<i64: 1, 64>}, {pipeline_mode = #tpu.pipeline_mode<synchronous>, transform_indices = @transform_5, window_bounds = array<i64: 64, 40>}, {pipeline_mode = #tpu.pipeline_mode<synchronous>, transform_indices = @transform_6, window_bounds = array<i64: 1, 40>}, {pipeline_mode = #tpu.pipeline_mode<synchronous>, transform_indices = @transform_7, window_bounds = array<i64: 40, 128>}, {pipeline_mode = #tpu.pipeline_mode<synchronous>, transform_indices = @transform_8, window_bounds = array<i64: 1, 128>}, {transform_indices = @transform_9, window_bounds = array<i64: 248, 128>}]} {
    %c0 = arith.constant 0 : index
    %c0_0 = arith.constant 0 : index
    %0 = vector.load %arg1[%c0, %c0_0] : memref<248x128xf32, #tpu.memory_space<vmem>>, vector<248x128xf32>
    %1 = arith.truncf %0 : vector<248x128xf32> to vector<248x128xbf16>
    %c0_1 = arith.constant 0 : index
    %c0_2 = arith.constant 0 : index
    %2 = vector.load %arg2[%c0_1, %c0_2] : memref<128x40xbf16, #tpu.memory_space<vmem>>, vector<128x40xbf16>
    %cst = arith.constant dense<0.000000e+00> : vector<248x40xf32>
    %3 = tpu.matmul %1, %2, %cst {dimension_numbers = #tpu.dot_dimension_numbers<[1], [0], [0], [1], [0, 0, 1, 1], [], []>} : vector<248x128xbf16>, vector<128x40xbf16>, vector<248x40xf32> -> vector<248x40xf32>
    %c0_3 = arith.constant 0 : index
    %c0_4 = arith.constant 0 : index
    %4 = vector.load %arg3[%c0_3, %c0_4] : memref<1x40xf32, #tpu.memory_space<vmem>>, vector<1x40xf32>
    %5 = vector.broadcast %4 : vector<1x40xf32> to vector<248x40xf32>
    %6 = arith.addf %3, %5 : vector<248x40xf32>
    %cst_5 = arith.constant 0.000000e+00 : f32
    %7 = vector.broadcast %cst_5 : f32 to vector<248x40xf32>
    %8 = arith.maximumf %6, %7 : vector<248x40xf32>
    %9 = arith.truncf %8 : vector<248x40xf32> to vector<248x40xbf16>
    %c0_6 = arith.constant 0 : index
    %c0_7 = arith.constant 0 : index
    %10 = vector.load %arg4[%c0_6, %c0_7] : memref<40x64xbf16, #tpu.memory_space<vmem>>, vector<40x64xbf16>
    %cst_8 = arith.constant dense<0.000000e+00> : vector<248x64xf32>
    %11 = tpu.matmul %9, %10, %cst_8 {dimension_numbers = #tpu.dot_dimension_numbers<[1], [0], [0], [1], [0, 0, 1, 1], [], []>} : vector<248x40xbf16>, vector<40x64xbf16>, vector<248x64xf32> -> vector<248x64xf32>
    %c0_9 = arith.constant 0 : index
    %c0_10 = arith.constant 0 : index
    %12 = vector.load %arg5[%c0_9, %c0_10] : memref<1x64xf32, #tpu.memory_space<vmem>>, vector<1x64xf32>
    %13 = vector.broadcast %12 : vector<1x64xf32> to vector<248x64xf32>
    %14 = arith.addf %11, %13 : vector<248x64xf32>
    %15 = arith.truncf %14 : vector<248x64xf32> to vector<248x64xbf16>
    %c0_11 = arith.constant 0 : index
    %c0_12 = arith.constant 0 : index
    %16 = vector.load %arg6[%c0_11, %c0_12] : memref<64x40xbf16, #tpu.memory_space<vmem>>, vector<64x40xbf16>
    %cst_13 = arith.constant dense<0.000000e+00> : vector<248x40xf32>
    %17 = tpu.matmul %15, %16, %cst_13 {dimension_numbers = #tpu.dot_dimension_numbers<[1], [0], [0], [1], [0, 0, 1, 1], [], []>} : vector<248x64xbf16>, vector<64x40xbf16>, vector<248x40xf32> -> vector<248x40xf32>
    %c0_14 = arith.constant 0 : index
    %c0_15 = arith.constant 0 : index
    %18 = vector.load %arg7[%c0_14, %c0_15] : memref<1x40xf32, #tpu.memory_space<vmem>>, vector<1x40xf32>
    %19 = vector.broadcast %18 : vector<1x40xf32> to vector<248x40xf32>
    %20 = arith.addf %17, %19 : vector<248x40xf32>
    %cst_16 = arith.constant 0.000000e+00 : f32
    %21 = vector.broadcast %cst_16 : f32 to vector<248x40xf32>
    %22 = arith.maximumf %20, %21 : vector<248x40xf32>
    %23 = arith.truncf %22 : vector<248x40xf32> to vector<248x40xbf16>
    %c0_17 = arith.constant 0 : index
    %c0_18 = arith.constant 0 : index
    %24 = vector.load %arg8[%c0_17, %c0_18] : memref<40x128xbf16, #tpu.memory_space<vmem>>, vector<40x128xbf16>
    %cst_19 = arith.constant dense<0.000000e+00> : vector<248x128xf32>
    %25 = tpu.matmul %23, %24, %cst_19 {dimension_numbers = #tpu.dot_dimension_numbers<[1], [0], [0], [1], [0, 0, 1, 1], [], []>} : vector<248x40xbf16>, vector<40x128xbf16>, vector<248x128xf32> -> vector<248x128xf32>
    %c0_20 = arith.constant 0 : index
    %c0_21 = arith.constant 0 : index
    %26 = vector.load %arg9[%c0_20, %c0_21] : memref<1x128xf32, #tpu.memory_space<vmem>>, vector<1x128xf32>
    %27 = vector.broadcast %26 : vector<1x128xf32> to vector<248x128xf32>
    %28 = arith.addf %25, %27 : vector<248x128xf32>
    %29 = arith.truncf %28 : vector<248x128xf32> to vector<248x128xbf16>
    %c0_22 = arith.constant 0 : index
    %c0_23 = arith.constant 0 : index
    %30 = vector.load %arg10[%c0_22, %c0_23] : memref<248x128xbf16, #tpu.memory_space<vmem>>, vector<248x128xbf16>
    tpu.vector_store %arg10[%c0_22, %c0_23], %29 {strides = array<i32>} : memref<248x128xbf16, #tpu.memory_space<vmem>>, vector<248x128xbf16>,
    return
  }
  func.func @transform_0(%arg0: i32) -> (i32, i32) {
    %c0_i32 = arith.constant 0 : i32
    %c0_i32_0 = arith.constant 0 : i32
    return %arg0, %c0_i32 : i32, i32
  }
  func.func @transform_1(%arg0: i32) -> (i32, i32) {
    %c0_i32 = arith.constant 0 : i32
    %c0_i32_0 = arith.constant 0 : i32
    %c0_i32_1 = arith.constant 0 : i32
    return %c0_i32, %c0_i32_0 : i32, i32
  }
  func.func @transform_2(%arg0: i32) -> (i32, i32) {
    %c0_i32 = arith.constant 0 : i32
    %c0_i32_0 = arith.constant 0 : i32
    %c0_i32_1 = arith.constant 0 : i32
    return %c0_i32, %c0_i32_0 : i32, i32
  }
  func.func @transform_3(%arg0: i32) -> (i32, i32) {
    %c0_i32 = arith.constant 0 : i32
    %c0_i32_0 = arith.constant 0 : i32
    %c0_i32_1 = arith.constant 0 : i32
    return %c0_i32, %c0_i32_0 : i32, i32
  }
  func.func @transform_4(%arg0: i32) -> (i32, i32) {
    %c0_i32 = arith.constant 0 : i32
    %c0_i32_0 = arith.constant 0 : i32
    %c0_i32_1 = arith.constant 0 : i32
    return %c0_i32, %c0_i32_0 : i32, i32
  }
  func.func @transform_5(%arg0: i32) -> (i32, i32) {
    %c0_i32 = arith.constant 0 : i32
    %c0_i32_0 = arith.constant 0 : i32
    %c0_i32_1 = arith.constant 0 : i32
    return %c0_i32, %c0_i32_0 : i32, i32
  }
  func.func @transform_6(%arg0: i32) -> (i32, i32) {
    %c0_i32 = arith.constant 0 : i32
    %c0_i32_0 = arith.constant 0 : i32
    %c0_i32_1 = arith.constant 0 : i32
    return %c0_i32, %c0_i32_0 : i32, i32
  }
  func.func @transform_7(%arg0: i32) -> (i32, i32) {
    %c0_i32 = arith.constant 0 : i32
    %c0_i32_0 = arith.constant 0 : i32
    %c0_i32_1 = arith.constant 0 : i32
    return %c0_i32, %c0_i32_0 : i32, i32
  }
  func.func @transform_8(%arg0: i32) -> (i32, i32) {
    %c0_i32 = arith.constant 0 : i32
    %c0_i32_0 = arith.constant 0 : i32
    %c0_i32_1 = arith.constant 0 : i32
    return %c0_i32, %c0_i32_0 : i32, i32
  }
  func.func @transform_9(%arg0: i32) -> (i32, i32) {
    %c0_i32 = arith.constant 0 : i32
    %c0_i32_0 = arith.constant 0 : i32
    return %arg0, %c0_i32 : i32, i32
  }
}

</mosaic_0001>

<llo_original>
// kernel: sdae_forward.1
$region0: #{sdae_forward.1}
  #allocation0 [shape = 'u32[]', space=smem, size = 0x4, offset = 0x4, fixed_abs, tag = 'smem constant byte address 0x4 - core index']
  #allocation1 [shape = 'u32[144,128]{1,0:T(1,128)}', space=vmem, size = 0x12000, scoped, tag = 'internal scratch']
  %s0 = inlined_call_operand.vmem [shape: f32[250,128], index: 0, kind: input, shape index: {}]
  %s1 = inlined_call_operand.vmem [shape: bf16[128,40], index: 1, kind: input, shape index: {}]
  %s2 = inlined_call_operand.vmem [shape: f32[1,40], index: 2, kind: input, shape index: {}]
  %s3 = inlined_call_operand.vmem [shape: bf16[40,64], index: 3, kind: input, shape index: {}]
  %s4 = inlined_call_operand.vmem [shape: f32[1,64], index: 4, kind: input, shape index: {}]
  %s5 = inlined_call_operand.vmem [shape: bf16[64,40], index: 5, kind: input, shape index: {}]
  %s6 = inlined_call_operand.vmem [shape: f32[1,40], index: 6, kind: input, shape index: {}]
  %s7 = inlined_call_operand.vmem [shape: bf16[40,128], index: 7, kind: input, shape index: {}]
  %s8 = inlined_call_operand.vmem [shape: f32[1,128], index: 8, kind: input, shape index: {}]
  %s9 = inlined_call_operand.vmem [shape: bf16[250,128], index: 9, kind: output, shape index: {}]
  %s10 = sld [smem:[#allocation0]]
  $region113: #{sdae_forward.1} parent=0
    _
  %s12 = ssub.s32 1, %s10
  %s13 = scalar_select 0, %s12, %s10
  $region1: #{sdae_forward.1} parent=0
    #allocation2 [shape = 'u8[126976]{0}', space=vmem, size = 0x1f000, scoped, tag = 'output window, operand 0']
    loop: start=0, step=1, limit=4
    $region2: #{sdae_forward.1} parent=1 // loop_pre_header
      _
    $region3: #{sdae_forward.1} parent=1 // loop_header
      %s15 = sphi 0, %s19
      %p16 = scmp.ge.s32.totalorder %s15, 4
      %s25 = sphi 0, %s27
      %s28 = sphi 0, %s25
      %s29 = sphi 0, %s28
      %s45 = sphi 0, %s29
      %s49 = sphi 0, %s49
      %s51 = sphi 0, %s49
      %s52 = sphi 0, %s51
      %s66 = sphi 0, %s52
      %s70 = sphi 0, %s70
      %s72 = sphi 0, %s70
      %s73 = sphi 0, %s72
      %s87 = sphi 0, %s73
      %s91 = sphi 0, %s91
      %s93 = sphi 0, %s91
      %s94 = sphi 0, %s93
      %s108 = sphi 0, %s94
      %s112 = sphi 0, %s112
      %s114 = sphi 0, %s112
      %s115 = sphi 0, %s114
      %s129 = sphi 0, %s115
      %s133 = sphi 0, %s133
      %s135 = sphi 0, %s133
      %s136 = sphi 0, %s135
      %s150 = sphi 0, %s136
      %s154 = sphi 0, %s154
      %s156 = sphi 0, %s154
      %s157 = sphi 0, %s156
      %s171 = sphi 0, %s157
      %s175 = sphi 0, %s175
      %s177 = sphi 0, %s175
      %s178 = sphi 0, %s177
      %s192 = sphi 0, %s178
      %s196 = sphi 0, %s196
      %s198 = sphi 0, %s196
      %s199 = sphi 0, %s198
      %s213 = sphi 0, %s199
      %s219 = sphi 0, %s221
      %s222 = sphi 0, %s219
      %s223 = sphi 0, %s222
      %s239 = sphi 0, %s223
    $region4: #{sdae_forward.1} parent=1 // loop_header_branch
      %18 = sbr.rel (%p16) target = $region8
    $region5: #{sdae_forward.1} parent=1 // loop_body
      %s20 = ssub.s32 %s15, 1
      %s21 = ssub.s32 %s15, 2
      %s22 = sadd.s32 %s15, 1
      %s23 = ssub.s32 %s15, %s22
      %p24 = scmp.eq.s32.totalorder %s23, 0
      %s26 = sadd.s32 %s25, 1
      %s27 = scalar_select %p24, %s25, %s26
      %p30 = pneg %p24
      %p31 = scmp.eq.s32.totalorder %s15, 1
      %p32 = por %p30, %p31
      %p33 = scmp.ne.s32.totalorder %s25, %s28
      %p34 = scmp.eq.s32.totalorder %s15, 0
      %p35 = por %p33, %p34
      %p36 = scmp.ne.s32.totalorder %s25, %s28
      %p37 = scmp.eq.s32.totalorder %s20, 1
      %p38 = por %p36, %p37
      %p39 = scmp.ne.s32.totalorder %s28, %s29
      %p40 = scmp.eq.s32.totalorder %s20, 0
      %p41 = por %p39, %p40
      %p42 = scmp.ne.s32.totalorder %s28, %s29
      %p43 = scmp.eq.s32.totalorder %s21, 1
      %p44 = por %p42, %p43
      %p46 = scmp.ne.s32.totalorder %s29, %s45
      %p47 = scmp.eq.s32.totalorder %s21, 0
      %p48 = por %p46, %p47
      %s50 = sadd.s32 %s49, 1
      %p53 = scmp.eq.s32.totalorder %s15, 1
      %p54 = scmp.ne.s32.totalorder %s49, %s51
      %p55 = scmp.eq.s32.totalorder %s15, 0
      %p56 = por %p54, %p55
      %p57 = scmp.ne.s32.totalorder %s49, %s51
      %p58 = scmp.eq.s32.totalorder %s20, 1
      %p59 = por %p57, %p58
      %p60 = scmp.ne.s32.totalorder %s51, %s52
      %p61 = scmp.eq.s32.totalorder %s20, 0
      %p62 = por %p60, %p61
      %p63 = scmp.ne.s32.totalorder %s51, %s52
      %p64 = scmp.eq.s32.totalorder %s21, 1
      %p65 = por %p63, %p64
      %p67 = scmp.ne.s32.totalorder %s52, %s66
      %p68 = scmp.eq.s32.totalorder %s21, 0
      %p69 = por %p67, %p68
      %s71 = sadd.s32 %s70, 1
      %p74 = scmp.eq.s32.totalorder %s15, 1
      %p75 = scmp.ne.s32.totalorder %s70, %s72
      %p76 = scmp.eq.s32.totalorder %s15, 0
      %p77 = por %p75, %p76
      %p78 = scmp.ne.s32.totalorder %s70, %s72
      %p79 = scmp.eq.s32.totalorder %s20, 1
      %p80 = por %p78, %p79
      %p81 = scmp.ne.s32.totalorder %s72, %s73
      %p82 = scmp.eq.s32.totalorder %s20, 0
      %p83 = por %p81, %p82
      %p84 = scmp.ne.s32.totalorder %s72, %s73
      %p85 = scmp.eq.s32.totalorder %s21, 1
      %p86 = por %p84, %p85
      %p88 = scmp.ne.s32.totalorder %s73, %s87
      %p89 = scmp.eq.s32.totalorder %s21, 0
      %p90 = por %p88, %p89
      %s92 = sadd.s32 %s91, 1
      %p95 = scmp.eq.s32.totalorder %s15, 1
      %p96 = scmp.ne.s32.totalorder %s91, %s93
      %p97 = scmp.eq.s32.totalorder %s15, 0
      %p98 = por %p96, %p97
      %p99 = scmp.ne.s32.totalorder %s91, %s93
      %p100 = scmp.eq.s32.totalorder %s20, 1
      %p101 = por %p99, %p100
      %p102 = scmp.ne.s32.totalorder %s93, %s94
      %p103 = scmp.eq.s32.totalorder %s20, 0
      %p104 = por %p102, %p103
      %p105 = scmp.ne.s32.totalorder %s93, %s94
      %p106 = scmp.eq.s32.totalorder %s21, 1
      %p107 = por %p105, %p106
      %p109 = scmp.ne.s32.totalorder %s94, %s108
      %p110 = scmp.eq.s32.totalorder %s21, 0
      %p111 = por %p109, %p110
      %s113 = sadd.s32 %s112, 1
      %p116 = scmp.eq.s32.totalorder %s15, 1
      %p117 = scmp.ne.s32.totalorder %s112, %s114
      %p118 = scmp.eq.s32.totalorder %s15, 0
      %p119 = por %p117, %p118
      %p120 = scmp.ne.s32.totalorder %s112, %s114
      %p121 = scmp.eq.s32.totalorder %s20, 1
      %p122 = por %p120, %p121
      %p123 = scmp.ne.s32.totalorder %s114, %s115
      %p124 = scmp.eq.s32.totalorder %s20, 0
      %p125 = por %p123, %p124
      %p126 = scmp.ne.s32.totalorder %s114, %s115
      %p127 = scmp.eq.s32.totalorder %s21, 1
      %p128 = por %p126, %p127
      %p130 = scmp.ne.s32.totalorder %s115, %s129
      %p131 = scmp.eq.s32.totalorder %s21, 0
      %p132 = por %p130, %p131
      %s134 = sadd.s32 %s133, 1
      %p137 = scmp.eq.s32.totalorder %s15, 1
      %p138 = scmp.ne.s32.totalorder %s133, %s135
      %p139 = scmp.eq.s32.totalorder %s15, 0
      %p140 = por %p138, %p139
      %p141 = scmp.ne.s32.totalorder %s133, %s135
      %p142 = scmp.eq.s32.totalorder %s20, 1
      %p143 = por %p141, %p142
      %p144 = scmp.ne.s32.totalorder %s135, %s136
      %p145 = scmp.eq.s32.totalorder %s20, 0
      %p146 = por %p144, %p145
      %p147 = scmp.ne.s32.totalorder %s135, %s136
      %p148 = scmp.eq.s32.totalorder %s21, 1
      %p149 = por %p147, %p148
      %p151 = scmp.ne.s32.totalorder %s136, %s150
      %p152 = scmp.eq.s32.totalorder %s21, 0
      %p153 = por %p151, %p152
      %s155 = sadd.s32 %s154, 1
      %p158 = scmp.eq.s32.totalorder %s15, 1
      %p159 = scmp.ne.s32.totalorder %s154, %s156
      %p160 = scmp.eq.s32.totalorder %s15, 0
      %p161 = por %p159, %p160
      %p162 = scmp.ne.s32.totalorder %s154, %s156
      %p163 = scmp.eq.s32.totalorder %s20, 1
      %p164 = por %p162, %p163
      %p165 = scmp.ne.s32.totalorder %s156, %s157
      %p166 = scmp.eq.s32.totalorder %s20, 0
      %p167 = por %p165, %p166
      %p168 = scmp.ne.s32.totalorder %s156, %s157
      %p169 = scmp.eq.s32.totalorder %s21, 1
      %p170 = por %p168, %p169
      %p172 = scmp.ne.s32.totalorder %s157, %s171
      %p173 = scmp.eq.s32.totalorder %s21, 0
      %p174 = por %p172, %p173
      %s176 = sadd.s32 %s175, 1
      %p179 = scmp.eq.s32.totalorder %s15, 1
      %p180 = scmp.ne.s32.totalorder %s175, %s177
      %p181 = scmp.eq.s32.totalorder %s15, 0
      %p182 = por %p180, %p181
      %p183 = scmp.ne.s32.totalorder %s175, %s177
      %p184 = scmp.eq.s32.totalorder %s20, 1
      %p185 = por %p183, %p184
      %p186 = scmp.ne.s32.totalorder %s177, %s178
      %p187 = scmp.eq.s32.totalorder %s20, 0
      %p188 = por %p186, %p187
      %p189 = scmp.ne.s32.totalorder %s177, %s178
      %p190 = scmp.eq.s32.totalorder %s21, 1
      %p191 = por %p189, %p190
      %p193 = scmp.ne.s32.totalorder %s178, %s192
      %p194 = scmp.eq.s32.totalorder %s21, 0
      %p195 = por %p193, %p194
      %s197 = sadd.s32 %s196, 1
      %p200 = scmp.eq.s32.totalorder %s15, 1
      %p201 = scmp.ne.s32.totalorder %s196, %s198
      %p202 = scmp.eq.s32.totalorder %s15, 0
      %p203 = por %p201, %p202
      %p204 = scmp.ne.s32.totalorder %s196, %s198
      %p205 = scmp.eq.s32.totalorder %s20, 1
      %p206 = por %p204, %p205
      %p207 = scmp.ne.s32.totalorder %s198, %s199
      %p208 = scmp.eq.s32.totalorder %s20, 0
      %p209 = por %p207, %p208
      %p210 = scmp.ne.s32.totalorder %s198, %s199
      %p211 = scmp.eq.s32.totalorder %s21, 1
      %p212 = por %p210, %p211
      %p214 = scmp.ne.s32.totalorder %s199, %s213
      %p215 = scmp.eq.s32.totalorder %s21, 0
      %p216 = por %p214, %p215
      %s217 = ssub.s32 %s15, %s22
      %p218 = scmp.eq.s32.totalorder %s217, 0
      %s220 = sadd.s32 %s219, 1
      %s221 = scalar_select %p218, %s219, %s220
      %p224 = pneg %p218
      %p225 = scmp.eq.s32.totalorder %s15, 1
      %p226 = por %p224, %p225
      %p227 = scmp.ne.s32.totalorder %s219, %s222
      %p228 = scmp.eq.s32.totalorder %s15, 0
      %p229 = por %p227, %p228
      %p230 = scmp.ne.s32.totalorder %s219, %s222
      %p231 = scmp.eq.s32.totalorder %s20, 1
      %p232 = por %p230, %p231
      %p233 = scmp.ne.s32.totalorder %s222, %s223
      %p234 = scmp.eq.s32.totalorder %s20, 0
      %p235 = por %p233, %p234
      %p236 = scmp.ne.s32.totalorder %s222, %s223
      %p237 = scmp.eq.s32.totalorder %s21, 1
      %p238 = por %p236, %p237
      %p240 = scmp.ne.s32.totalorder %s223, %s239
      %p241 = scmp.eq.s32.totalorder %s21, 0
      %p242 = por %p240, %p241
      %p243 = scmp.le.s32.totalorder 1, %s15
      %p244 = scmp.lt.s32.totalorder %s15, 3
      %p245 = pnand %p243, %p244
      %p246 = pneg %p245
      // Predicated region
      $region9: #{sdae_forward.1} parent=5 // pred_check
        _
      $region10: #{sdae_forward.1} parent=5 // pred_check_branch
        %248 = sbr.rel (%p245) target = $region12
      $region11: #{sdae_forward.1} parent=5 // pred_region
        %s249 = ssub.s32 %s15, 1
        // Predicated region
        $region13: #{sdae_forward.1} parent=11 // pred_check
          %p250 = pneg %p62
        $region14: #{sdae_forward.1} parent=11 // pred_check_branch
          %252 = sbr.rel (%p250) target = $region16
        $region15: #{sdae_forward.1} parent=11 // pred_region
          _
        $region16: #{sdae_forward.1} parent=11 // pred_fallthru
          _
        // Predicated region
        $region17: #{sdae_forward.1} parent=11 // pred_check
          %p253 = pneg %p83
        $region18: #{sdae_forward.1} parent=11 // pred_check_branch
          %255 = sbr.rel (%p253) target = $region20
        $region19: #{sdae_forward.1} parent=11 // pred_region
          _
        $region20: #{sdae_forward.1} parent=11 // pred_fallthru
          _
        // Predicated region
        $region21: #{sdae_forward.1} parent=11 // pred_check
          %p256 = pneg %p104
        $region22: #{sdae_forward.1} parent=11 // pred_check_branch
          %258 = sbr.rel (%p256) target = $region24
        $region23: #{sdae_forward.1} parent=11 // pred_region
          _
        $region24: #{sdae_forward.1} parent=11 // pred_fallthru
          _
        // Predicated region
        $region25: #{sdae_forward.1} parent=11 // pred_check
          %p259 = pneg %p125
        $region26: #{sdae_forward.1} parent=11 // pred_check_branch
          %261 = sbr.rel (%p259) target = $region28
        $region27: #{sdae_forward.1} parent=11 // pred_region
          _
        $region28: #{sdae_forward.1} parent=11 // pred_fallthru
          _
        // Predicated region
        $region29: #{sdae_forward.1} parent=11 // pred_check
          %p262 = pneg %p146
        $region30: #{sdae_forward.1} parent=11 // pred_check_branch
          %264 = sbr.rel (%p262) target = $region32
        $region31: #{sdae_forward.1} parent=11 // pred_region
          _
        $region32: #{sdae_forward.1} parent=11 // pred_fallthru
          _
        // Predicated region
        $region33: #{sdae_forward.1} parent=11 // pred_check
          %p265 = pneg %p167
        $region34: #{sdae_forward.1} parent=11 // pred_check_branch
          %267 = sbr.rel (%p265) target = $region36
        $region35: #{sdae_forward.1} parent=11 // pred_region
          _
        $region36: #{sdae_forward.1} parent=11 // pred_fallthru
          _
        // Predicated region
        $region37: #{sdae_forward.1} parent=11 // pred_check
          %p268 = pneg %p188
        $region38: #{sdae_forward.1} parent=11 // pred_check_branch
          %270 = sbr.rel (%p268) target = $region40
        $region39: #{sdae_forward.1} parent=11 // pred_region
          _
        $region40: #{sdae_forward.1} parent=11 // pred_fallthru
          _
        // Predicated region
        $region41: #{sdae_forward.1} parent=11 // pred_check
          %p271 = pneg %p209
        $region42: #{sdae_forward.1} parent=11 // pred_check_branch
          %273 = sbr.rel (%p271) target = $region44
        $region43: #{sdae_forward.1} parent=11 // pred_region
          _
        $region44: #{sdae_forward.1} parent=11 // pred_fallthru
          _
      $region12: #{sdae_forward.1} parent=5 // pred_fallthru
        _
      %p274 = scmp.lt.s32.totalorder %s15, 2
      // Predicated region
      $region45: #{sdae_forward.1} parent=5 // pred_check
        %p275 = pneg %p274
      $region46: #{sdae_forward.1} parent=5 // pred_check_branch
        %277 = sbr.rel (%p275) target = $region48
      $region47: #{sdae_forward.1} parent=5 // pred_region
        // Predicated region
        $region49: #{sdae_forward.1} parent=47 // pred_check
          %p278 = pneg %p35
        $region50: #{sdae_forward.1} parent=47 // pred_check_branch
          %280 = sbr.rel (%p278) target = $region52
        $region51: #{sdae_forward.1} parent=47 // pred_region
          %s281 = smul.u32 31, %s15
          %s282 = ssub.s32 32, %s281
          %p283 = scmp.lt.s32.totalorder %s282, 31
          %s284 = scalar_select %p283, %s282, 31
          %s285 = smul.u32 128, %s284
          %p286 = scmp.lt.s32.totalorder %s281, 31
          %s287 = scalar_select %p286, %s281, 31
          %s288 = smul.addr %s287, 8
          %s289 = scalar_lea.vmem %s0, %s288
          %s290 = smul.u32 31, %s15
          %s291 = ssub.s32 32, %s290
          %p292 = scmp.lt.s32.totalorder %s291, 31
          %s293 = scalar_select %p292, %s291, 31
          %s294 = smul.u32 128, %s293
        $region52: #{sdae_forward.1} parent=47 // pred_fallthru
          _
      $region48: #{sdae_forward.1} parent=5 // pred_fallthru
        _
      %p295 = scmp.le.s32.totalorder 1, %s15
      %p296 = scmp.lt.s32.totalorder %s15, 3
      %p297 = pnand %p295, %p296
      %p298 = pneg %p297
      // Predicated region
      $region53: #{sdae_forward.1} parent=5 // pred_check
        _
      $region54: #{sdae_forward.1} parent=5 // pred_check_branch
        %300 = sbr.rel (%p297) target = $region56
      $region55: #{sdae_forward.1} parent=5 // pred_region
        %s301 = ssub.s32 %s15, 1
        %s302 = smul.u32 31, %s20
        %s303 = ssub.s32 32, %s302
        %p304 = scmp.lt.s32.totalorder %s303, 31
        %s305 = scalar_select %p304, %s303, 31
        %s306 = smul.u32 128, %s305
        %p307 = scmp.lt.s32.totalorder %s302, 31
        %s308 = scalar_select %p307, %s302, 31
        %s309 = smul.addr %s308, 8
        %s310 = scalar_lea.vmem %s0, %s309
        %p311 = pneg %p41
        %p312 = pneg %p38
        %p313 = pneg %p62
        %p314 = pneg %p59
        %p315 = pneg %p83
        %p316 = pneg %p80
        %p317 = pneg %p104
        %p318 = pneg %p101
        %p319 = pneg %p125
        %p320 = pneg %p122
        %p321 = pneg %p146
        %p322 = pneg %p143
        %p323 = pneg %p167
        %p324 = pneg %p164
        %p325 = pneg %p188
        %p326 = pneg %p185
        %p327 = pneg %p209
        %p328 = pneg %p206
        %p329 = pneg %p235
        %p330 = pneg %p232
        %s331 = sand.u32 %s222, 1
        %s332 = sand.u32 %s222, 1
        %s333 = smul.addr %s332, 124
        %s334 = scalar_lea.vmem [#allocation2], %s333
        %s335 = smul.u32 31, %s20
        %s336 = ssub.s32 32, %s335
        %p337 = scmp.lt.s32.totalorder %s336, 31
        %s338 = scalar_select %p337, %s336, 31
        %s339 = smul.u32 128, %s338
        %p340 = scmp.lt.s32.totalorder %s335, 31
        %s341 = scalar_select %p340, %s335, 31
        %s342 = smul.addr %s341, 8
        %s343 = scalar_lea.vmem %s0, %s342
        %s344 = smul.u32 31, %s20
        %s345 = ssub.s32 32, %s344
        %p346 = scmp.lt.s32.totalorder %s345, 31
        %s347 = scalar_select %p346, %s345, 31
        %s348 = smul.u32 128, %s347
        %s349 = smul.u32 31, %s20
        %s350 = ssub.s32 32, %s349
        %p351 = scmp.lt.s32.totalorder %s350, 31
        %s352 = scalar_select %p351, %s350, 31
        %s353 = smul.u32 64, %s352
        %v355 = vld [vmem:[%s343] sm:$0xff]
        %v356 = vld [vmem:[%s343 + $0x8] sm:$0xff]
        %v357 = vld [vmem:[%s343 + $0x10] sm:$0xff]
        %v358 = vld [vmem:[%s343 + $0x18] sm:$0xff]
        %v359 = vld [vmem:[%s343 + $0x20] sm:$0xff]
        %v360 = vld [vmem:[%s343 + $0x28] sm:$0xff]
        %v361 = vld [vmem:[%s343 + $0x30] sm:$0xff]
        %v362 = vld [vmem:[%s343 + $0x38] sm:$0xff]
        %v363 = vld [vmem:[%s343 + $0x40] sm:$0xff]
        %v364 = vld [vmem:[%s343 + $0x48] sm:$0xff]
        %v365 = vld [vmem:[%s343 + $0x50] sm:$0xff]
        %v366 = vld [vmem:[%s343 + $0x58] sm:$0xff]
        %v367 = vld [vmem:[%s343 + $0x60] sm:$0xff]
        %v368 = vld [vmem:[%s343 + $0x68] sm:$0xff]
        %v369 = vld [vmem:[%s343 + $0x70] sm:$0xff]
        %v370 = vld [vmem:[%s343 + $0x78] sm:$0xff]
        %v371 = vld [vmem:[%s343 + $0x80] sm:$0xff]
        %v372 = vld [vmem:[%s343 + $0x88] sm:$0xff]
        %v373 = vld [vmem:[%s343 + $0x90] sm:$0xff]
        %v374 = vld [vmem:[%s343 + $0x98] sm:$0xff]
        %v375 = vld [vmem:[%s343 + $0xa0] sm:$0xff]
        %v376 = vld [vmem:[%s343 + $0xa8] sm:$0xff]
        %v377 = vld [vmem:[%s343 + $0xb0] sm:$0xff]
        %v378 = vld [vmem:[%s343 + $0xb8] sm:$0xff]
        %v379 = vld [vmem:[%s343 + $0xc0] sm:$0xff]
        %v380 = vld [vmem:[%s343 + $0xc8] sm:$0xff]
        %v381 = vld [vmem:[%s343 + $0xd0] sm:$0xff]
        %v382 = vld [vmem:[%s343 + $0xd8] sm:$0xff]
        %v383 = vld [vmem:[%s343 + $0xe0] sm:$0xff]
        %v384 = vld [vmem:[%s343 + $0xe8] sm:$0xff]
        %v385 = vld [vmem:[%s343 + $0xf0] sm:$0xff]
        %v386 = vpack.c.bf16 %v356, %v355
        %v387 = vpack.c.bf16 %v358, %v357
        %v388 = vpack.c.bf16 %v360, %v359
        %v389 = vpack.c.bf16 %v362, %v361
        %v390 = vpack.c.bf16 %v364, %v363
        %v391 = vpack.c.bf16 %v366, %v365
        %v392 = vpack.c.bf16 %v368, %v367
        %v393 = vpack.c.bf16 %v370, %v369
        %v394 = vpack.c.bf16 %v372, %v371
        %v395 = vpack.c.bf16 %v374, %v373
        %v396 = vpack.c.bf16 %v376, %v375
        %v397 = vpack.c.bf16 %v378, %v377
        %v398 = vpack.c.bf16 %v380, %v379
        %v399 = vpack.c.bf16 %v382, %v381
        %v400 = vpack.c.bf16 %v384, %v383
        %v401 = vpack.c.bf16 %v385, %v385
        %v402 = vld [vmem:[%s1] sm:$0xf]
        %v403 = vld [vmem:[%s1 + $0x4] sm:$0xf]
        %v404 = vld [vmem:[%s1 + $0x8] sm:$0xf]
        %v405 = vld [vmem:[%s1 + $0xc] sm:$0xf]
        %v406 = vld [vmem:[%s1 + $0x10] sm:$0xf]
        %v407 = vld [vmem:[%s1 + $0x14] sm:$0xf]
        %v408 = vld [vmem:[%s1 + $0x18] sm:$0xf]
        %v409 = vld [vmem:[%s1 + $0x1c] sm:$0xf]
        %v410 = vld [vmem:[%s1 + $0x20] sm:$0xf]
        %v411 = vld [vmem:[%s1 + $0x24] sm:$0xf]
        %v412 = vld [vmem:[%s1 + $0x28] sm:$0xf]
        %v413 = vld [vmem:[%s1 + $0x2c] sm:$0xf]
        %v414 = vld [vmem:[%s1 + $0x30] sm:$0xf]
        %v415 = vld [vmem:[%s1 + $0x34] sm:$0xf]
        %v416 = vld [vmem:[%s1 + $0x38] sm:$0xf]
        %v417 = vld [vmem:[%s1 + $0x3c] sm:$0xf]
        %v418 = vld [vmem:[%s2] sm:$0x1]
        %v420 = vlaneseq
        %v421 = vshrl.u32 %v420, 7
        %v422 = vsub.s32 0, %v421
        %v423 = vrot.slane %v418, %v422
        %v441 = vunpack.c.l.b16 %v402
        %v442 = vunpack.c.l.b16 %v403
        %v443 = vunpack.c.l.b16 %v404
        %v444 = vunpack.c.l.b16 %v405
        %v445 = vunpack.c.l.b16 %v406
        %v446 = vunpack.c.l.b16 %v407
        %v447 = vunpack.c.l.b16 %v408
        %v448 = vunpack.c.l.b16 %v409
        %v449 = vunpack.c.l.b16 %v410
        %v450 = vunpack.c.l.b16 %v411
        %v451 = vunpack.c.l.b16 %v412
        %v452 = vunpack.c.l.b16 %v413
        %v453 = vunpack.c.l.b16 %v414
        %v454 = vunpack.c.l.b16 %v415
        %v455 = vunpack.c.l.b16 %v416
        %v456 = vunpack.c.l.b16 %v417
        %v457 = vpack.c.b16 %v442, %v441
        %v458 = vpack.c.b16 %v444, %v443
        %v459 = vpack.c.b16 %v446, %v445
        %v460 = vpack.c.b16 %v448, %v447
        %v461 = vpack.c.b16 %v450, %v449
        %v462 = vpack.c.b16 %v452, %v451
        %v463 = vpack.c.b16 %v454, %v453
        %v464 = vpack.c.b16 %v456, %v455
        %473 = vmatprep.subr.bf16.mxu0 0
        %474 = vmatpush1.bf16.msra.mxu0 %v457
        %475 = vmatprep.subr.bf16.mxu0 0
        %476 = vmatpush1.bf16.msra.mxu0 %v458
        %477 = vmatprep.subr.bf16.mxu0 0
        %478 = vmatpush1.bf16.msra.mxu0 %v459
        %479 = vmatprep.subr.bf16.mxu0 0
        %480 = vmatpush1.bf16.msra.mxu0 %v460
        %481 = vmatprep.subr.bf16.mxu0 0
        %482 = vmatpush1.bf16.msra.mxu0 %v461
        %483 = vmatprep.subr.bf16.mxu0 0
        %484 = vmatpush1.bf16.msra.mxu0 %v462
        %485 = vmatprep.subr.bf16.mxu0 0
        %486 = vmatpush1.bf16.msra.mxu0 %v463
        %487 = vmatprep.subr.bf16.mxu0 0
        %488 = vmatpush1.bf16.msra.mxu0 %v464
        %489 = vmatprep.subr.bf16.mxu0 0
        %490 = vmatpush1.bf16.msra.mxu0 0
        %491 = vmatprep.subr.bf16.mxu0 0
        %492 = vmatpush1.bf16.msra.mxu0 0
        %493 = vmatprep.subr.bf16.mxu0 0
        %494 = vmatpush1.bf16.msra.mxu0 0
        %495 = vmatprep.subr.bf16.mxu0 0
        %496 = vmatpush1.bf16.msra.mxu0 0
        %497 = vmatprep.subr.bf16.mxu0 0
        %498 = vmatpush1.bf16.msra.mxu0 0
        %499 = vmatprep.subr.bf16.mxu0 0
        %500 = vmatpush1.bf16.msra.mxu0 0
        %501 = vmatprep.subr.bf16.mxu0 0
        %502 = vmatpush1.bf16.msra.mxu0 0
        %503 = vmatprep.subr.bf16.mxu0 0
        %504 = vmatpush1.bf16.msra.mxu0 0
        %505 = vmatprep.mubr.bf16.mxu0 0
        %506 = vmatmul.mubr.bf16.gmra.mrb[0].mxu0 %v386
        %v507 = vpop.f32.mrb[0].mxu0
        %v508 = vadd.f32 %v423, %v507
        %v509 = vpop.f32.mrb[0].mxu0
        %v510 = vpop.f32.mrb[0].mxu0
        %v511 = vadd.f32 %v423, %v510
        %v512 = vpop.f32.mrb[0].mxu0
        %513 = vmatprep.mubr.bf16.mxu0 0
        %514 = vmatmul.mubr.bf16.gmra.mrb[0].mxu0 %v387
        %v515 = vpop.f32.mrb[0].mxu0
        %v516 = vadd.f32 %v423, %v515
        %v517 = vpop.f32.mrb[0].mxu0
        %v518 = vpop.f32.mrb[0].mxu0
        %v519 = vadd.f32 %v423, %v518
        %v520 = vpop.f32.mrb[0].mxu0
        %521 = vmatprep.mubr.bf16.mxu0 0
        %522 = vmatmul.mubr.bf16.gmra.mrb[0].mxu0 %v388
        %v523 = vpop.f32.mrb[0].mxu0
        %v524 = vadd.f32 %v423, %v523
        %v525 = vpop.f32.mrb[0].mxu0
        %v526 = vpop.f32.mrb[0].mxu0
        %v527 = vadd.f32 %v423, %v526
        %v528 = vpop.f32.mrb[0].mxu0
        %529 = vmatprep.mubr.bf16.mxu0 0
        %530 = vmatmul.mubr.bf16.gmra.mrb[0].mxu0 %v389
        %v531 = vpop.f32.mrb[0].mxu0
        %v532 = vadd.f32 %v423, %v531
        %v533 = vpop.f32.mrb[0].mxu0
        %v534 = vpop.f32.mrb[0].mxu0
        %v535 = vadd.f32 %v423, %v534
        %v536 = vpop.f32.mrb[0].mxu0
        %537 = vmatprep.mubr.bf16.mxu0 0
        %538 = vmatmul.mubr.bf16.gmra.mrb[0].mxu0 %v390
        %v539 = vpop.f32.mrb[0].mxu0
        %v540 = vadd.f32 %v423, %v539
        %v541 = vpop.f32.mrb[0].mxu0
        %v542 = vpop.f32.mrb[0].mxu0
        %v543 = vadd.f32 %v423, %v542
        %v544 = vpop.f32.mrb[0].mxu0
        %545 = vmatprep.mubr.bf16.mxu0 0
        %546 = vmatmul.mubr.bf16.gmra.mrb[0].mxu0 %v391
        %v547 = vpop.f32.mrb[0].mxu0
        %v548 = vadd.f32 %v423, %v547
        %v549 = vpop.f32.mrb[0].mxu0
        %v550 = vpop.f32.mrb[0].mxu0
        %v551 = vadd.f32 %v423, %v550
        %v552 = vpop.f32.mrb[0].mxu0
        %553 = vmatprep.mubr.bf16.mxu0 0
        %554 = vmatmul.mubr.bf16.gmra.mrb[0].mxu0 %v392
        %v555 = vpop.f32.mrb[0].mxu0
        %v556 = vadd.f32 %v423, %v555
        %v557 = vpop.f32.mrb[0].mxu0
        %v558 = vpop.f32.mrb[0].mxu0
        %v559 = vadd.f32 %v423, %v558
        %v560 = vpop.f32.mrb[0].mxu0
        %561 = vmatprep.mubr.bf16.mxu0 0
        %562 = vmatmul.mubr.bf16.gmra.mrb[0].mxu0 %v393
        %v563 = vpop.f32.mrb[0].mxu0
        %v564 = vadd.f32 %v423, %v563
        %v565 = vpop.f32.mrb[0].mxu0
        %v566 = vpop.f32.mrb[0].mxu0
        %v567 = vadd.f32 %v423, %v566
        %v568 = vpop.f32.mrb[0].mxu0
        %569 = vmatprep.mubr.bf16.mxu0 0
        %570 = vmatmul.mubr.bf16.gmra.mrb[0].mxu0 %v394
        %v571 = vpop.f32.mrb[0].mxu0
        %v572 = vadd.f32 %v423, %v571
        %v573 = vpop.f32.mrb[0].mxu0
        %v574 = vpop.f32.mrb[0].mxu0
        %v575 = vadd.f32 %v423, %v574
        %v576 = vpop.f32.mrb[0].mxu0
        %577 = vmatprep.mubr.bf16.mxu0 0
        %578 = vmatmul.mubr.bf16.gmra.mrb[0].mxu0 %v395
        %v579 = vpop.f32.mrb[0].mxu0
        %v580 = vadd.f32 %v423, %v579
        %v581 = vpop.f32.mrb[0].mxu0
        %v582 = vpop.f32.mrb[0].mxu0
        %v583 = vadd.f32 %v423, %v582
        %v584 = vpop.f32.mrb[0].mxu0
        %585 = vmatprep.mubr.bf16.mxu0 0
        %586 = vmatmul.mubr.bf16.gmra.mrb[0].mxu0 %v396
        %v587 = vpop.f32.mrb[0].mxu0
        %v588 = vadd.f32 %v423, %v587
        %v589 = vpop.f32.mrb[0].mxu0
        %v590 = vpop.f32.mrb[0].mxu0
        %v591 = vadd.f32 %v423, %v590
        %v592 = vpop.f32.mrb[0].mxu0
        %593 = vmatprep.mubr.bf16.mxu0 0
        %594 = vmatmul.mubr.bf16.gmra.mrb[0].mxu0 %v397
        %v595 = vpop.f32.mrb[0].mxu0
        %v596 = vadd.f32 %v423, %v595
        %v597 = vpop.f32.mrb[0].mxu0
        %v598 = vpop.f32.mrb[0].mxu0
        %v599 = vadd.f32 %v423, %v598
        %v600 = vpop.f32.mrb[0].mxu0
        %601 = vmatprep.mubr.bf16.mxu0 0
        %602 = vmatmul.mubr.bf16.gmra.mrb[0].mxu0 %v398
        %v603 = vpop.f32.mrb[0].mxu0
        %v604 = vadd.f32 %v423, %v603
        %v605 = vpop.f32.mrb[0].mxu0
        %v606 = vpop.f32.mrb[0].mxu0
        %v607 = vadd.f32 %v423, %v606
        %v608 = vpop.f32.mrb[0].mxu0
        %609 = vmatprep.mubr.bf16.mxu0 0
        %610 = vmatmul.mubr.bf16.gmra.mrb[0].mxu0 %v399
        %v611 = vpop.f32.mrb[0].mxu0
        %v612 = vadd.f32 %v423, %v611
        %v613 = vpop.f32.mrb[0].mxu0
        %v614 = vpop.f32.mrb[0].mxu0
        %v615 = vadd.f32 %v423, %v614
        %v616 = vpop.f32.mrb[0].mxu0
        %617 = vmatprep.mubr.bf16.mxu0 0
        %618 = vmatmul.mubr.bf16.gmra.mrb[0].mxu0 %v400
        %v619 = vpop.f32.mrb[0].mxu0
        %v620 = vadd.f32 %v423, %v619
        %v621 = vpop.f32.mrb[0].mxu0
        %v622 = vpop.f32.mrb[0].mxu0
        %v623 = vadd.f32 %v423, %v622
        %v624 = vpop.f32.mrb[0].mxu0
        %625 = vmatprep.mubr.bf16.mxu0 0
        %626 = vmatmul.mubr.bf16.gmra.mrb[0].mxu0 %v401
        %v627 = vpop.f32.mrb[0].mxu0
        %v628 = vadd.f32 %v423, %v627
        %v629 = vpop.f32.mrb[0].mxu0
        %v630 = vpop.f32.mrb[0].mxu0
        %v631 = vpop.f32.mrb[0].mxu0
        %632 = vdwg.mxu0
        %v633 = vmax.f32 %v508, 0.0
        %v634 = vmax.f32 %v511, 0.0
        %v635 = vmax.f32 %v516, 0.0
        %v636 = vmax.f32 %v519, 0.0
        %v637 = vmax.f32 %v524, 0.0
        %v638 = vmax.f32 %v527, 0.0
        %v639 = vmax.f32 %v532, 0.0
        %v640 = vmax.f32 %v535, 0.0
        %v641 = vmax.f32 %v540, 0.0
        %v642 = vmax.f32 %v543, 0.0
        %v643 = vmax.f32 %v548, 0.0
        %v644 = vmax.f32 %v551, 0.0
        %v645 = vmax.f32 %v556, 0.0
        %v646 = vmax.f32 %v559, 0.0
        %v647 = vmax.f32 %v564, 0.0
        %v648 = vmax.f32 %v567, 0.0
        %v649 = vmax.f32 %v572, 0.0
        %v650 = vmax.f32 %v575, 0.0
        %v651 = vmax.f32 %v580, 0.0
        %v652 = vmax.f32 %v583, 0.0
        %v653 = vmax.f32 %v588, 0.0
        %v654 = vmax.f32 %v591, 0.0
        %v655 = vmax.f32 %v596, 0.0
        %v656 = vmax.f32 %v599, 0.0
        %v657 = vmax.f32 %v604, 0.0
        %v658 = vmax.f32 %v607, 0.0
        %v659 = vmax.f32 %v612, 0.0
        %v660 = vmax.f32 %v615, 0.0
        %v661 = vmax.f32 %v620, 0.0
        %v662 = vmax.f32 %v623, 0.0
        %v663 = vmax.f32 %v628, 0.0
        %v664 = vpack.c.bf16 %v634, %v633
        %v665 = vpack.c.bf16 %v636, %v635
        %v666 = vpack.c.bf16 %v638, %v637
        %v667 = vpack.c.bf16 %v640, %v639
        %v668 = vpack.c.bf16 %v642, %v641
        %v669 = vpack.c.bf16 %v644, %v643
        %v670 = vpack.c.bf16 %v646, %v645
        %v671 = vpack.c.bf16 %v648, %v647
        %v672 = vpack.c.bf16 %v650, %v649
        %v673 = vpack.c.bf16 %v652, %v651
        %v674 = vpack.c.bf16 %v654, %v653
        %v675 = vpack.c.bf16 %v656, %v655
        %v676 = vpack.c.bf16 %v658, %v657
        %v677 = vpack.c.bf16 %v660, %v659
        %v678 = vpack.c.bf16 %v662, %v661
        %v679 = vpack.c.bf16 %v663, %v663
        %v680 = vld [vmem:[%s3] sm:$0xf]
        %v681 = vld [vmem:[%s3 + $0x4] sm:$0xf]
        %v682 = vld [vmem:[%s3 + $0x8] sm:$0xf]
        %v683 = vld [vmem:[%s3 + $0xc] sm:$0xf]
        %v684 = vld [vmem:[%s3 + $0x10] sm:$0xf]
        %v685 = vld [vmem:[%s4] sm:$0x1]
        %v687 = vlaneseq
        %v688 = vshrl.u32 %v687, 7
        %v689 = vsub.s32 0, %v688
        %v690 = vrot.slane %v685, %v689
        %v697 = vunpack.c.l.b16 %v680
        %v698 = vunpack.c.l.b16 %v681
        %v699 = vunpack.c.l.b16 %v682
        %v700 = vunpack.c.l.b16 %v683
        %v701 = vunpack.c.l.b16 %v684
        %v702 = vpack.c.b16 %v698, %v697
        %v703 = vpack.c.b16 %v700, %v699
        %v704 = vpack.c.b16 %v701, %v701
        %vm707 = vcmask 326656
        %v709 = vsel %vm707, %v664, 0
        %v712 = vsel %vm707, %v665, 0
        %v715 = vsel %vm707, %v666, 0
        %v718 = vsel %vm707, %v667, 0
        %v721 = vsel %vm707, %v668, 0
        %v724 = vsel %vm707, %v669, 0
        %v727 = vsel %vm707, %v670, 0
        %v730 = vsel %vm707, %v671, 0
        %v733 = vsel %vm707, %v672, 0
        %v736 = vsel %vm707, %v673, 0
        %v739 = vsel %vm707, %v674, 0
        %v742 = vsel %vm707, %v675, 0
        %v745 = vsel %vm707, %v676, 0
        %v748 = vsel %vm707, %v677, 0
        %v751 = vsel %vm707, %v678, 0
        %v754 = vsel %vm707, %v679, 0
        %vm756 = vcmask 1043456
        %v758 = vsel %vm756, %v704, 0
        %760 = vmatprep.subr.bf16.mxu0 0
        %761 = vmatpush1.bf16.msra.mxu0 %v702
        %762 = vmatprep.subr.bf16.mxu0 0
        %763 = vmatpush1.bf16.msra.mxu0 %v703
        %764 = vmatprep.subr.bf16.mxu0 0
        %765 = vmatpush1.bf16.msra.mxu0 %v758
        %766 = vmatprep.subr.bf16.mxu0 0
        %767 = vmatpush1.bf16.msra.mxu0 0
        %768 = vmatprep.subr.bf16.mxu0 0
        %769 = vmatpush1.bf16.msra.mxu0 0
        %770 = vmatprep.subr.bf16.mxu0 0
        %771 = vmatpush1.bf16.msra.mxu0 0
        %772 = vmatprep.subr.bf16.mxu0 0
        %773 = vmatpush1.bf16.msra.mxu0 0
        %774 = vmatprep.subr.bf16.mxu0 0
        %775 = vmatpush1.bf16.msra.mxu0 0
        %776 = vmatprep.subr.bf16.mxu0 0
        %777 = vmatpush1.bf16.msra.mxu0 0
        %778 = vmatprep.subr.bf16.mxu0 0
        %779 = vmatpush1.bf16.msra.mxu0 0
        %780 = vmatprep.subr.bf16.mxu0 0
        %781 = vmatpush1.bf16.msra.mxu0 0
        %782 = vmatprep.subr.bf16.mxu0 0
        %783 = vmatpush1.bf16.msra.mxu0 0
        %784 = vmatprep.subr.bf16.mxu0 0
        %785 = vmatpush1.bf16.msra.mxu0 0
        %786 = vmatprep.subr.bf16.mxu0 0
        %787 = vmatpush1.bf16.msra.mxu0 0
        %788 = vmatprep.subr.bf16.mxu0 0
        %789 = vmatpush1.bf16.msra.mxu0 0
        %790 = vmatprep.subr.bf16.mxu0 0
        %791 = vmatpush1.bf16.msra.mxu0 0
        %792 = vmatprep.mubr.bf16.mxu0 0
        %793 = vmatmul.mubr.bf16.gmra.mrb[0].mxu0 %v709
        %v794 = vpop.f32.mrb[0].mxu0
        %v795 = vadd.f32 %v690, %v794
        %v796 = vpop.f32.mrb[0].mxu0
        %v797 = vpop.f32.mrb[0].mxu0
        %v798 = vadd.f32 %v690, %v797
        %v799 = vpop.f32.mrb[0].mxu0
        %800 = vmatprep.mubr.bf16.mxu0 0
        %801 = vmatmul.mubr.bf16.gmra.mrb[0].mxu0 %v712
        %v802 = vpop.f32.mrb[0].mxu0
        %v803 = vadd.f32 %v690, %v802
        %v804 = vpop.f32.mrb[0].mxu0
        %v805 = vpop.f32.mrb[0].mxu0
        %v806 = vadd.f32 %v690, %v805
        %v807 = vpop.f32.mrb[0].mxu0
        %808 = vmatprep.mubr.bf16.mxu0 0
        %809 = vmatmul.mubr.bf16.gmra.mrb[0].mxu0 %v715
        %v810 = vpop.f32.mrb[0].mxu0
        %v811 = vadd.f32 %v690, %v810
        %v812 = vpop.f32.mrb[0].mxu0
        %v813 = vpop.f32.mrb[0].mxu0
        %v814 = vadd.f32 %v690, %v813
        %v815 = vpop.f32.mrb[0].mxu0
        %816 = vmatprep.mubr.bf16.mxu0 0
        %817 = vmatmul.mubr.bf16.gmra.mrb[0].mxu0 %v718
        %v818 = vpop.f32.mrb[0].mxu0
        %v819 = vadd.f32 %v690, %v818
        %v820 = vpop.f32.mrb[0].mxu0
        %v821 = vpop.f32.mrb[0].mxu0
        %v822 = vadd.f32 %v690, %v821
        %v823 = vpop.f32.mrb[0].mxu0
        %824 = vmatprep.mubr.bf16.mxu0 0
        %825 = vmatmul.mubr.bf16.gmra.mrb[0].mxu0 %v721
        %v826 = vpop.f32.mrb[0].mxu0
        %v827 = vadd.f32 %v690, %v826
        %v828 = vpop.f32.mrb[0].mxu0
        %v829 = vpop.f32.mrb[0].mxu0
        %v830 = vadd.f32 %v690, %v829
        %v831 = vpop.f32.mrb[0].mxu0
        %832 = vmatprep.mubr.bf16.mxu0 0
        %833 = vmatmul.mubr.bf16.gmra.mrb[0].mxu0 %v724
        %v834 = vpop.f32.mrb[0].mxu0
        %v835 = vadd.f32 %v690, %v834
        %v836 = vpop.f32.mrb[0].mxu0
        %v837 = vpop.f32.mrb[0].mxu0
        %v838 = vadd.f32 %v690, %v837
        %v839 = vpop.f32.mrb[0].mxu0
        %840 = vmatprep.mubr.bf16.mxu0 0
        %841 = vmatmul.mubr.bf16.gmra.mrb[0].mxu0 %v727
        %v842 = vpop.f32.mrb[0].mxu0
        %v843 = vadd.f32 %v690, %v842
        %v844 = vpop.f32.mrb[0].mxu0
        %v845 = vpop.f32.mrb[0].mxu0
        %v846 = vadd.f32 %v690, %v845
        %v847 = vpop.f32.mrb[0].mxu0
        %848 = vmatprep.mubr.bf16.mxu0 0
        %849 = vmatmul.mubr.bf16.gmra.mrb[0].mxu0 %v730
        %v850 = vpop.f32.mrb[0].mxu0
        %v851 = vadd.f32 %v690, %v850
        %v852 = vpop.f32.mrb[0].mxu0
        %v853 = vpop.f32.mrb[0].mxu0
        %v854 = vadd.f32 %v690, %v853
        %v855 = vpop.f32.mrb[0].mxu0
        %856 = vmatprep.mubr.bf16.mxu0 0
        %857 = vmatmul.mubr.bf16.gmra.mrb[0].mxu0 %v733
        %v858 = vpop.f32.mrb[0].mxu0
        %v859 = vadd.f32 %v690, %v858
        %v860 = vpop.f32.mrb[0].mxu0
        %v861 = vpop.f32.mrb[0].mxu0
        %v862 = vadd.f32 %v690, %v861
        %v863 = vpop.f32.mrb[0].mxu0
        %864 = vmatprep.mubr.bf16.mxu0 0
        %865 = vmatmul.mubr.bf16.gmra.mrb[0].mxu0 %v736
        %v866 = vpop.f32.mrb[0].mxu0
        %v867 = vadd.f32 %v690, %v866
        %v868 = vpop.f32.mrb[0].mxu0
        %v869 = vpop.f32.mrb[0].mxu0
        %v870 = vadd.f32 %v690, %v869
        %v871 = vpop.f32.mrb[0].mxu0
        %872 = vmatprep.mubr.bf16.mxu0 0
        %873 = vmatmul.mubr.bf16.gmra.mrb[0].mxu0 %v739
        %v874 = vpop.f32.mrb[0].mxu0
        %v875 = vadd.f32 %v690, %v874
        %v876 = vpop.f32.mrb[0].mxu0
        %v877 = vpop.f32.mrb[0].mxu0
        %v878 = vadd.f32 %v690, %v877
        %v879 = vpop.f32.mrb[0].mxu0
        %880 = vmatprep.mubr.bf16.mxu0 0
        %881 = vmatmul.mubr.bf16.gmra.mrb[0].mxu0 %v742
        %v882 = vpop.f32.mrb[0].mxu0
        %v883 = vadd.f32 %v690, %v882
        %v884 = vpop.f32.mrb[0].mxu0
        %v885 = vpop.f32.mrb[0].mxu0
        %v886 = vadd.f32 %v690, %v885
        %v887 = vpop.f32.mrb[0].mxu0
        %888 = vmatprep.mubr.bf16.mxu0 0
        %889 = vmatmul.mubr.bf16.gmra.mrb[0].mxu0 %v745
        %v890 = vpop.f32.mrb[0].mxu0
        %v891 = vadd.f32 %v690, %v890
        %v892 = vpop.f32.mrb[0].mxu0
        %v893 = vpop.f32.mrb[0].mxu0
        %v894 = vadd.f32 %v690, %v893
        %v895 = vpop.f32.mrb[0].mxu0
        %896 = vmatprep.mubr.bf16.mxu0 0
        %897 = vmatmul.mubr.bf16.gmra.mrb[0].mxu0 %v748
        %v898 = vpop.f32.mrb[0].mxu0
        %v899 = vadd.f32 %v690, %v898
        %v900 = vpop.f32.mrb[0].mxu0
        %v901 = vpop.f32.mrb[0].mxu0
        %v902 = vadd.f32 %v690, %v901
        %v903 = vpop.f32.mrb[0].mxu0
        %904 = vmatprep.mubr.bf16.mxu0 0
        %905 = vmatmul.mubr.bf16.gmra.mrb[0].mxu0 %v751
        %v906 = vpop.f32.mrb[0].mxu0
        %v907 = vadd.f32 %v690, %v906
        %v908 = vpop.f32.mrb[0].mxu0
        %v909 = vpop.f32.mrb[0].mxu0
        %v910 = vadd.f32 %v690, %v909
        %v911 = vpop.f32.mrb[0].mxu0
        %912 = vmatprep.mubr.bf16.mxu0 0
        %913 = vmatmul.mubr.bf16.gmra.mrb[0].mxu0 %v754
        %v914 = vpop.f32.mrb[0].mxu0
        %v915 = vadd.f32 %v690, %v914
        %v916 = vpop.f32.mrb[0].mxu0
        %v917 = vpop.f32.mrb[0].mxu0
        %v918 = vpop.f32.mrb[0].mxu0
        %919 = vdwg.mxu0
        %v920 = vpack.c.bf16 %v798, %v795
        %v921 = vpack.c.bf16 %v806, %v803
        %v922 = vpack.c.bf16 %v814, %v811
        %v923 = vpack.c.bf16 %v822, %v819
        %v924 = vpack.c.bf16 %v830, %v827
        %v925 = vpack.c.bf16 %v838, %v835
        %v926 = vpack.c.bf16 %v846, %v843
        %v927 = vpack.c.bf16 %v854, %v851
        %v928 = vpack.c.bf16 %v862, %v859
        %v929 = vpack.c.bf16 %v870, %v867
        %v930 = vpack.c.bf16 %v878, %v875
        %v931 = vpack.c.bf16 %v886, %v883
        %v932 = vpack.c.bf16 %v894, %v891
        %v933 = vpack.c.bf16 %v902, %v899
        %v934 = vpack.c.bf16 %v910, %v907
        %v935 = vpack.c.bf16 %v915, %v915
        %v936 = vld [vmem:[%s5] sm:$0xf]
        %v937 = vld [vmem:[%s5 + $0x4] sm:$0xf]
        %v938 = vld [vmem:[%s5 + $0x8] sm:$0xf]
        %v939 = vld [vmem:[%s5 + $0xc] sm:$0xf]
        %v940 = vld [vmem:[%s5 + $0x10] sm:$0xf]
        %v941 = vld [vmem:[%s5 + $0x14] sm:$0xf]
        %v942 = vld [vmem:[%s5 + $0x18] sm:$0xf]
        %v943 = vld [vmem:[%s5 + $0x1c] sm:$0xf]
        %v944 = vld [vmem:[%s6] sm:$0x1]
        %v946 = vlaneseq
        %v947 = vshrl.u32 %v946, 7
        %v948 = vsub.s32 0, %v947
        %v949 = vrot.slane %v944, %v948
        %v959 = vunpack.c.l.b16 %v936
        %v960 = vunpack.c.l.b16 %v937
        %v961 = vunpack.c.l.b16 %v938
        %v962 = vunpack.c.l.b16 %v939
        %v963 = vunpack.c.l.b16 %v940
        %v964 = vunpack.c.l.b16 %v941
        %v965 = vunpack.c.l.b16 %v942
        %v966 = vunpack.c.l.b16 %v943
        %v967 = vpack.c.b16 %v960, %v959
        %v968 = vpack.c.b16 %v962, %v961
        %v969 = vpack.c.b16 %v964, %v963
        %v970 = vpack.c.b16 %v966, %v965
        %vm975 = vcmask 523264
        %v977 = vsel %vm975, %v920, 0
        %v980 = vsel %vm975, %v921, 0
        %v983 = vsel %vm975, %v922, 0
        %v986 = vsel %vm975, %v923, 0
        %v989 = vsel %vm975, %v924, 0
        %v992 = vsel %vm975, %v925, 0
        %v995 = vsel %vm975, %v926, 0
        %v998 = vsel %vm975, %v927, 0
        %v1001 = vsel %vm975, %v928, 0
        %v1004 = vsel %vm975, %v929, 0
        %v1007 = vsel %vm975, %v930, 0
        %v1010 = vsel %vm975, %v931, 0
        %v1013 = vsel %vm975, %v932, 0
        %v1016 = vsel %vm975, %v933, 0
        %v1019 = vsel %vm975, %v934, 0
        %v1022 = vsel %vm975, %v935, 0
        %1024 = vmatprep.subr.bf16.mxu0 0
        %1025 = vmatpush1.bf16.msra.mxu0 %v967
        %1026 = vmatprep.subr.bf16.mxu0 0
        %1027 = vmatpush1.bf16.msra.mxu0 %v968
        %1028 = vmatprep.subr.bf16.mxu0 0
        %1029 = vmatpush1.bf16.msra.mxu0 %v969
        %1030 = vmatprep.subr.bf16.mxu0 0
        %1031 = vmatpush1.bf16.msra.mxu0 %v970
        %1032 = vmatprep.subr.bf16.mxu0 0
        %1033 = vmatpush1.bf16.msra.mxu0 0
        %1034 = vmatprep.subr.bf16.mxu0 0
        %1035 = vmatpush1.bf16.msra.mxu0 0
        %1036 = vmatprep.subr.bf16.mxu0 0
        %1037 = vmatpush1.bf16.msra.mxu0 0
        %1038 = vmatprep.subr.bf16.mxu0 0
        %1039 = vmatpush1.bf16.msra.mxu0 0
        %1040 = vmatprep.subr.bf16.mxu0 0
        %1041 = vmatpush1.bf16.msra.mxu0 0
        %1042 = vmatprep.subr.bf16.mxu0 0
        %1043 = vmatpush1.bf16.msra.mxu0 0
        %1044 = vmatprep.subr.bf16.mxu0 0
        %1045 = vmatpush1.bf16.msra.mxu0 0
        %1046 = vmatprep.subr.bf16.mxu0 0
        %1047 = vmatpush1.bf16.msra.mxu0 0
        %1048 = vmatprep.subr.bf16.mxu0 0
        %1049 = vmatpush1.bf16.msra.mxu0 0
        %1050 = vmatprep.subr.bf16.mxu0 0
        %1051 = vmatpush1.bf16.msra.mxu0 0
        %1052 = vmatprep.subr.bf16.mxu0 0
        %1053 = vmatpush1.bf16.msra.mxu0 0
        %1054 = vmatprep.subr.bf16.mxu0 0
        %1055 = vmatpush1.bf16.msra.mxu0 0
        %1056 = vmatprep.mubr.bf16.mxu0 0
        %1057 = vmatmul.mubr.bf16.gmra.mrb[0].mxu0 %v977
        %v1058 = vpop.f32.mrb[0].mxu0
        %v1059 = vadd.f32 %v949, %v1058
        %v1060 = vpop.f32.mrb[0].mxu0
        %v1061 = vpop.f32.mrb[0].mxu0
        %v1062 = vadd.f32 %v949, %v1061
        %v1063 = vpop.f32.mrb[0].mxu0
        %1064 = vmatprep.mubr.bf16.mxu0 0
        %1065 = vmatmul.mubr.bf16.gmra.mrb[0].mxu0 %v980
        %v1066 = vpop.f32.mrb[0].mxu0
        %v1067 = vadd.f32 %v949, %v1066
        %v1068 = vpop.f32.mrb[0].mxu0
        %v1069 = vpop.f32.mrb[0].mxu0
        %v1070 = vadd.f32 %v949, %v1069
        %v1071 = vpop.f32.mrb[0].mxu0
        %1072 = vmatprep.mubr.bf16.mxu0 0
        %1073 = vmatmul.mubr.bf16.gmra.mrb[0].mxu0 %v983
        %v1074 = vpop.f32.mrb[0].mxu0
        %v1075 = vadd.f32 %v949, %v1074
        %v1076 = vpop.f32.mrb[0].mxu0
        %v1077 = vpop.f32.mrb[0].mxu0
        %v1078 = vadd.f32 %v949, %v1077
        %v1079 = vpop.f32.mrb[0].mxu0
        %1080 = vmatprep.mubr.bf16.mxu0 0
        %1081 = vmatmul.mubr.bf16.gmra.mrb[0].mxu0 %v986
        %v1082 = vpop.f32.mrb[0].mxu0
        %v1083 = vadd.f32 %v949, %v1082
        %v1084 = vpop.f32.mrb[0].mxu0
        %v1085 = vpop.f32.mrb[0].mxu0
        %v1086 = vadd.f32 %v949, %v1085
        %v1087 = vpop.f32.mrb[0].mxu0
        %1088 = vmatprep.mubr.bf16.mxu0 0
        %1089 = vmatmul.mubr.bf16.gmra.mrb[0].mxu0 %v989
        %v1090 = vpop.f32.mrb[0].mxu0
        %v1091 = vadd.f32 %v949, %v1090
        %v1092 = vpop.f32.mrb[0].mxu0
        %v1093 = vpop.f32.mrb[0].mxu0
        %v1094 = vadd.f32 %v949, %v1093
        %v1095 = vpop.f32.mrb[0].mxu0
        %1096 = vmatprep.mubr.bf16.mxu0 0
        %1097 = vmatmul.mubr.bf16.gmra.mrb[0].mxu0 %v992
        %v1098 = vpop.f32.mrb[0].mxu0
        %v1099 = vadd.f32 %v949, %v1098
        %v1100 = vpop.f32.mrb[0].mxu0
        %v1101 = vpop.f32.mrb[0].mxu0
        %v1102 = vadd.f32 %v949, %v1101
        %v1103 = vpop.f32.mrb[0].mxu0
        %1104 = vmatprep.mubr.bf16.mxu0 0
        %1105 = vmatmul.mubr.bf16.gmra.mrb[0].mxu0 %v995
        %v1106 = vpop.f32.mrb[0].mxu0
        %v1107 = vadd.f32 %v949, %v1106
        %v1108 = vpop.f32.mrb[0].mxu0
        %v1109 = vpop.f32.mrb[0].mxu0
        %v1110 = vadd.f32 %v949, %v1109
        %v1111 = vpop.f32.mrb[0].mxu0
        %1112 = vmatprep.mubr.bf16.mxu0 0
        %1113 = vmatmul.mubr.bf16.gmra.mrb[0].mxu0 %v998
        %v1114 = vpop.f32.mrb[0].mxu0
        %v1115 = vadd.f32 %v949, %v1114
        %v1116 = vpop.f32.mrb[0].mxu0
        %v1117 = vpop.f32.mrb[0].mxu0
        %v1118 = vadd.f32 %v949, %v1117
        %v1119 = vpop.f32.mrb[0].mxu0
        %1120 = vmatprep.mubr.bf16.mxu0 0
        %1121 = vmatmul.mubr.bf16.gmra.mrb[0].mxu0 %v1001
        %v1122 = vpop.f32.mrb[0].mxu0
        %v1123 = vadd.f32 %v949, %v1122
        %v1124 = vpop.f32.mrb[0].mxu0
        %v1125 = vpop.f32.mrb[0].mxu0
        %v1126 = vadd.f32 %v949, %v1125
        %v1127 = vpop.f32.mrb[0].mxu0
        %1128 = vmatprep.mubr.bf16.mxu0 0
        %1129 = vmatmul.mubr.bf16.gmra.mrb[0].mxu0 %v1004
        %v1130 = vpop.f32.mrb[0].mxu0
        %v1131 = vadd.f32 %v949, %v1130
        %v1132 = vpop.f32.mrb[0].mxu0
        %v1133 = vpop.f32.mrb[0].mxu0
        %v1134 = vadd.f32 %v949, %v1133
        %v1135 = vpop.f32.mrb[0].mxu0
        %1136 = vmatprep.mubr.bf16.mxu0 0
        %1137 = vmatmul.mubr.bf16.gmra.mrb[0].mxu0 %v1007
        %v1138 = vpop.f32.mrb[0].mxu0
        %v1139 = vadd.f32 %v949, %v1138
        %v1140 = vpop.f32.mrb[0].mxu0
        %v1141 = vpop.f32.mrb[0].mxu0
        %v1142 = vadd.f32 %v949, %v1141
        %v1143 = vpop.f32.mrb[0].mxu0
        %1144 = vmatprep.mubr.bf16.mxu0 0
        %1145 = vmatmul.mubr.bf16.gmra.mrb[0].mxu0 %v1010
        %v1146 = vpop.f32.mrb[0].mxu0
        %v1147 = vadd.f32 %v949, %v1146
        %v1148 = vpop.f32.mrb[0].mxu0
        %v1149 = vpop.f32.mrb[0].mxu0
        %v1150 = vadd.f32 %v949, %v1149
        %v1151 = vpop.f32.mrb[0].mxu0
        %1152 = vmatprep.mubr.bf16.mxu0 0
        %1153 = vmatmul.mubr.bf16.gmra.mrb[0].mxu0 %v1013
        %v1154 = vpop.f32.mrb[0].mxu0
        %v1155 = vadd.f32 %v949, %v1154
        %v1156 = vpop.f32.mrb[0].mxu0
        %v1157 = vpop.f32.mrb[0].mxu0
        %v1158 = vadd.f32 %v949, %v1157
        %v1159 = vpop.f32.mrb[0].mxu0
        %1160 = vmatprep.mubr.bf16.mxu0 0
        %1161 = vmatmul.mubr.bf16.gmra.mrb[0].mxu0 %v1016
        %v1162 = vpop.f32.mrb[0].mxu0
        %v1163 = vadd.f32 %v949, %v1162
        %v1164 = vpop.f32.mrb[0].mxu0
        %v1165 = vpop.f32.mrb[0].mxu0
        %v1166 = vadd.f32 %v949, %v1165
        %v1167 = vpop.f32.mrb[0].mxu0
        %1168 = vmatprep.mubr.bf16.mxu0 0
        %1169 = vmatmul.mubr.bf16.gmra.mrb[0].mxu0 %v1019
        %v1170 = vpop.f32.mrb[0].mxu0
        %v1171 = vadd.f32 %v949, %v1170
        %v1172 = vpop.f32.mrb[0].mxu0
        %v1173 = vpop.f32.mrb[0].mxu0
        %v1174 = vadd.f32 %v949, %v1173
        %v1175 = vpop.f32.mrb[0].mxu0
        %1176 = vmatprep.mubr.bf16.mxu0 0
        %1177 = vmatmul.mubr.bf16.gmra.mrb[0].mxu0 %v1022
        %v1178 = vpop.f32.mrb[0].mxu0
        %v1179 = vadd.f32 %v949, %v1178
        %v1180 = vpop.f32.mrb[0].mxu0
        %v1181 = vpop.f32.mrb[0].mxu0
        %v1182 = vpop.f32.mrb[0].mxu0
        %1183 = vdwg.mxu0
        %v1184 = vmax.f32 %v1059, 0.0
        %v1185 = vmax.f32 %v1062, 0.0
        %v1186 = vmax.f32 %v1067, 0.0
        %v1187 = vmax.f32 %v1070, 0.0
        %v1188 = vmax.f32 %v1075, 0.0
        %v1189 = vmax.f32 %v1078, 0.0
        %v1190 = vmax.f32 %v1083, 0.0
        %v1191 = vmax.f32 %v1086, 0.0
        %v1192 = vmax.f32 %v1091, 0.0
        %v1193 = vmax.f32 %v1094, 0.0
        %v1194 = vmax.f32 %v1099, 0.0
        %v1195 = vmax.f32 %v1102, 0.0
        %v1196 = vmax.f32 %v1107, 0.0
        %v1197 = vmax.f32 %v1110, 0.0
        %v1198 = vmax.f32 %v1115, 0.0
        %v1199 = vmax.f32 %v1118, 0.0
        %v1200 = vmax.f32 %v1123, 0.0
        %v1201 = vmax.f32 %v1126, 0.0
        %v1202 = vmax.f32 %v1131, 0.0
        %v1203 = vmax.f32 %v1134, 0.0
        %v1204 = vmax.f32 %v1139, 0.0
        %v1205 = vmax.f32 %v1142, 0.0
        %v1206 = vmax.f32 %v1147, 0.0
        %v1207 = vmax.f32 %v1150, 0.0
        %v1208 = vmax.f32 %v1155, 0.0
        %v1209 = vmax.f32 %v1158, 0.0
        %v1210 = vmax.f32 %v1163, 0.0
        %v1211 = vmax.f32 %v1166, 0.0
        %v1212 = vmax.f32 %v1171, 0.0
        %v1213 = vmax.f32 %v1174, 0.0
        %v1214 = vmax.f32 %v1179, 0.0
        %v1215 = vpack.c.bf16 %v1185, %v1184
        %v1216 = vpack.c.bf16 %v1187, %v1186
        %v1217 = vpack.c.bf16 %v1189, %v1188
        %v1218 = vpack.c.bf16 %v1191, %v1190
        %v1219 = vpack.c.bf16 %v1193, %v1192
        %v1220 = vpack.c.bf16 %v1195, %v1194
        %v1221 = vpack.c.bf16 %v1197, %v1196
        %v1222 = vpack.c.bf16 %v1199, %v1198
        %v1223 = vpack.c.bf16 %v1201, %v1200
        %v1224 = vpack.c.bf16 %v1203, %v1202
        %v1225 = vpack.c.bf16 %v1205, %v1204
        %v1226 = vpack.c.bf16 %v1207, %v1206
        %v1227 = vpack.c.bf16 %v1209, %v1208
        %v1228 = vpack.c.bf16 %v1211, %v1210
        %v1229 = vpack.c.bf16 %v1213, %v1212
        %v1230 = vpack.c.bf16 %v1214, %v1214
        %v1231 = vld [vmem:[%s7] sm:$0xf]
        %v1232 = vld [vmem:[%s7 + $0x4] sm:$0xf]
        %v1233 = vld [vmem:[%s7 + $0x8] sm:$0xf]
        %v1234 = vld [vmem:[%s7 + $0xc] sm:$0xf]
        %v1235 = vld [vmem:[%s7 + $0x10] sm:$0xf]
        %v1236 = vld [vmem:[%s8] sm:$0x1]
        %v1238 = vlaneseq
        %v1239 = vshrl.u32 %v1238, 7
        %v1240 = vsub.s32 0, %v1239
        %v1241 = vrot.slane %v1236, %v1240
        %v1248 = vunpack.c.l.b16 %v1231
        %v1249 = vunpack.c.l.b16 %v1232
        %v1250 = vunpack.c.l.b16 %v1233
        %v1251 = vunpack.c.l.b16 %v1234
        %v1252 = vunpack.c.l.b16 %v1235
        %v1253 = vpack.c.b16 %v1249, %v1248
        %v1254 = vpack.c.b16 %v1251, %v1250
        %v1255 = vpack.c.b16 %v1252, %v1252
        %v1259 = vsel %vm707, %v1215, 0
        %v1262 = vsel %vm707, %v1216, 0
        %v1265 = vsel %vm707, %v1217, 0
        %v1268 = vsel %vm707, %v1218, 0
        %v1271 = vsel %vm707, %v1219, 0
        %v1274 = vsel %vm707, %v1220, 0
        %v1277 = vsel %vm707, %v1221, 0
        %v1280 = vsel %vm707, %v1222, 0
        %v1283 = vsel %vm707, %v1223, 0
        %v1286 = vsel %vm707, %v1224, 0
        %v1289 = vsel %vm707, %v1225, 0
        %v1292 = vsel %vm707, %v1226, 0
        %v1295 = vsel %vm707, %v1227, 0
        %v1298 = vsel %vm707, %v1228, 0
        %v1301 = vsel %vm707, %v1229, 0
        %v1304 = vsel %vm707, %v1230, 0
        %v1307 = vsel %vm756, %v1255, 0
        %1309 = vmatprep.subr.bf16.mxu0 0
        %1310 = vmatpush1.bf16.msra.mxu0 %v1253
        %1311 = vmatprep.subr.bf16.mxu0 0
        %1312 = vmatpush1.bf16.msra.mxu0 %v1254
        %1313 = vmatprep.subr.bf16.mxu0 0
        %1314 = vmatpush1.bf16.msra.mxu0 %v1307
        %1315 = vmatprep.subr.bf16.mxu0 0
        %1316 = vmatpush1.bf16.msra.mxu0 0
        %1317 = vmatprep.subr.bf16.mxu0 0
        %1318 = vmatpush1.bf16.msra.mxu0 0
        %1319 = vmatprep.subr.bf16.mxu0 0
        %1320 = vmatpush1.bf16.msra.mxu0 0
        %1321 = vmatprep.subr.bf16.mxu0 0
        %1322 = vmatpush1.bf16.msra.mxu0 0
        %1323 = vmatprep.subr.bf16.mxu0 0
        %1324 = vmatpush1.bf16.msra.mxu0 0
        %1325 = vmatprep.subr.bf16.mxu0 0
        %1326 = vmatpush1.bf16.msra.mxu0 0
        %1327 = vmatprep.subr.bf16.mxu0 0
        %1328 = vmatpush1.bf16.msra.mxu0 0
        %1329 = vmatprep.subr.bf16.mxu0 0
        %1330 = vmatpush1.bf16.msra.mxu0 0
        %1331 = vmatprep.subr.bf16.mxu0 0
        %1332 = vmatpush1.bf16.msra.mxu0 0
        %1333 = vmatprep.subr.bf16.mxu0 0
        %1334 = vmatpush1.bf16.msra.mxu0 0
        %1335 = vmatprep.subr.bf16.mxu0 0
        %1336 = vmatpush1.bf16.msra.mxu0 0
        %1337 = vmatprep.subr.bf16.mxu0 0
        %1338 = vmatpush1.bf16.msra.mxu0 0
        %1339 = vmatprep.subr.bf16.mxu0 0
        %1340 = vmatpush1.bf16.msra.mxu0 0
        %1341 = vmatprep.mubr.bf16.mxu0 0
        %1342 = vmatmul.mubr.bf16.gmra.mrb[0].mxu0 %v1259
        %v1343 = vpop.f32.mrb[0].mxu0
        %v1344 = vadd.f32 %v1241, %v1343
        %v1345 = vpop.f32.mrb[0].mxu0
        %v1346 = vpop.f32.mrb[0].mxu0
        %v1347 = vadd.f32 %v1241, %v1346
        %v1348 = vpop.f32.mrb[0].mxu0
        %1349 = vmatprep.mubr.bf16.mxu0 0
        %1350 = vmatmul.mubr.bf16.gmra.mrb[0].mxu0 %v1262
        %v1351 = vpop.f32.mrb[0].mxu0
        %v1352 = vadd.f32 %v1241, %v1351
        %v1353 = vpop.f32.mrb[0].mxu0
        %v1354 = vpop.f32.mrb[0].mxu0
        %v1355 = vadd.f32 %v1241, %v1354
        %v1356 = vpop.f32.mrb[0].mxu0
        %1357 = vmatprep.mubr.bf16.mxu0 0
        %1358 = vmatmul.mubr.bf16.gmra.mrb[0].mxu0 %v1265
        %v1359 = vpop.f32.mrb[0].mxu0
        %v1360 = vadd.f32 %v1241, %v1359
        %v1361 = vpop.f32.mrb[0].mxu0
        %v1362 = vpop.f32.mrb[0].mxu0
        %v1363 = vadd.f32 %v1241, %v1362
        %v1364 = vpop.f32.mrb[0].mxu0
        %1365 = vmatprep.mubr.bf16.mxu0 0
        %1366 = vmatmul.mubr.bf16.gmra.mrb[0].mxu0 %v1268
        %v1367 = vpop.f32.mrb[0].mxu0
        %v1368 = vadd.f32 %v1241, %v1367
        %v1369 = vpop.f32.mrb[0].mxu0
        %v1370 = vpop.f32.mrb[0].mxu0
        %v1371 = vadd.f32 %v1241, %v1370
        %v1372 = vpop.f32.mrb[0].mxu0
        %1373 = vmatprep.mubr.bf16.mxu0 0
        %1374 = vmatmul.mubr.bf16.gmra.mrb[0].mxu0 %v1271
        %v1375 = vpop.f32.mrb[0].mxu0
        %v1376 = vadd.f32 %v1241, %v1375
        %v1377 = vpop.f32.mrb[0].mxu0
        %v1378 = vpop.f32.mrb[0].mxu0
        %v1379 = vadd.f32 %v1241, %v1378
        %v1380 = vpop.f32.mrb[0].mxu0
        %1381 = vmatprep.mubr.bf16.mxu0 0
        %1382 = vmatmul.mubr.bf16.gmra.mrb[0].mxu0 %v1274
        %v1383 = vpop.f32.mrb[0].mxu0
        %v1384 = vadd.f32 %v1241, %v1383
        %v1385 = vpop.f32.mrb[0].mxu0
        %v1386 = vpop.f32.mrb[0].mxu0
        %v1387 = vadd.f32 %v1241, %v1386
        %v1388 = vpop.f32.mrb[0].mxu0
        %1389 = vmatprep.mubr.bf16.mxu0 0
        %1390 = vmatmul.mubr.bf16.gmra.mrb[0].mxu0 %v1277
        %v1391 = vpop.f32.mrb[0].mxu0
        %v1392 = vadd.f32 %v1241, %v1391
        %v1393 = vpop.f32.mrb[0].mxu0
        %v1394 = vpop.f32.mrb[0].mxu0
        %v1395 = vadd.f32 %v1241, %v1394
        %v1396 = vpop.f32.mrb[0].mxu0
        %1397 = vmatprep.mubr.bf16.mxu0 0
        %1398 = vmatmul.mubr.bf16.gmra.mrb[0].mxu0 %v1280
        %v1399 = vpop.f32.mrb[0].mxu0
        %v1400 = vadd.f32 %v1241, %v1399
        %v1401 = vpop.f32.mrb[0].mxu0
        %v1402 = vpop.f32.mrb[0].mxu0
        %v1403 = vadd.f32 %v1241, %v1402
        %v1404 = vpop.f32.mrb[0].mxu0
        %1405 = vmatprep.mubr.bf16.mxu0 0
        %1406 = vmatmul.mubr.bf16.gmra.mrb[0].mxu0 %v1283
        %v1407 = vpop.f32.mrb[0].mxu0
        %v1408 = vadd.f32 %v1241, %v1407
        %v1409 = vpop.f32.mrb[0].mxu0
        %v1410 = vpop.f32.mrb[0].mxu0
        %v1411 = vadd.f32 %v1241, %v1410
        %v1412 = vpop.f32.mrb[0].mxu0
        %1413 = vmatprep.mubr.bf16.mxu0 0
        %1414 = vmatmul.mubr.bf16.gmra.mrb[0].mxu0 %v1286
        %v1415 = vpop.f32.mrb[0].mxu0
        %v1416 = vadd.f32 %v1241, %v1415
        %v1417 = vpop.f32.mrb[0].mxu0
        %v1418 = vpop.f32.mrb[0].mxu0
        %v1419 = vadd.f32 %v1241, %v1418
        %v1420 = vpop.f32.mrb[0].mxu0
        %1421 = vmatprep.mubr.bf16.mxu0 0
        %1422 = vmatmul.mubr.bf16.gmra.mrb[0].mxu0 %v1289
        %v1423 = vpop.f32.mrb[0].mxu0
        %v1424 = vadd.f32 %v1241, %v1423
        %v1425 = vpop.f32.mrb[0].mxu0
        %v1426 = vpop.f32.mrb[0].mxu0
        %v1427 = vadd.f32 %v1241, %v1426
        %v1428 = vpop.f32.mrb[0].mxu0
        %1429 = vmatprep.mubr.bf16.mxu0 0
        %1430 = vmatmul.mubr.bf16.gmra.mrb[0].mxu0 %v1292
        %v1431 = vpop.f32.mrb[0].mxu0
        %v1432 = vadd.f32 %v1241, %v1431
        %v1433 = vpop.f32.mrb[0].mxu0
        %v1434 = vpop.f32.mrb[0].mxu0
        %v1435 = vadd.f32 %v1241, %v1434
        %v1436 = vpop.f32.mrb[0].mxu0
        %1437 = vmatprep.mubr.bf16.mxu0 0
        %1438 = vmatmul.mubr.bf16.gmra.mrb[0].mxu0 %v1295
        %v1439 = vpop.f32.mrb[0].mxu0
        %v1440 = vadd.f32 %v1241, %v1439
        %v1441 = vpop.f32.mrb[0].mxu0
        %v1442 = vpop.f32.mrb[0].mxu0
        %v1443 = vadd.f32 %v1241, %v1442
        %v1444 = vpop.f32.mrb[0].mxu0
        %1445 = vmatprep.mubr.bf16.mxu0 0
        %1446 = vmatmul.mubr.bf16.gmra.mrb[0].mxu0 %v1298
        %v1447 = vpop.f32.mrb[0].mxu0
        %v1448 = vadd.f32 %v1241, %v1447
        %v1449 = vpop.f32.mrb[0].mxu0
        %v1450 = vpop.f32.mrb[0].mxu0
        %v1451 = vadd.f32 %v1241, %v1450
        %v1452 = vpop.f32.mrb[0].mxu0
        %1453 = vmatprep.mubr.bf16.mxu0 0
        %1454 = vmatmul.mubr.bf16.gmra.mrb[0].mxu0 %v1301
        %v1455 = vpop.f32.mrb[0].mxu0
        %v1456 = vadd.f32 %v1241, %v1455
        %v1457 = vpop.f32.mrb[0].mxu0
        %v1458 = vpop.f32.mrb[0].mxu0
        %v1459 = vadd.f32 %v1241, %v1458
        %v1460 = vpop.f32.mrb[0].mxu0
        %1461 = vmatprep.mubr.bf16.mxu0 0
        %1462 = vmatmul.mubr.bf16.gmra.mrb[0].mxu0 %v1304
        %v1463 = vpop.f32.mrb[0].mxu0
        %v1464 = vadd.f32 %v1241, %v1463
        %v1465 = vpop.f32.mrb[0].mxu0
        %v1466 = vpop.f32.mrb[0].mxu0
        %v1467 = vpop.f32.mrb[0].mxu0
        %1468 = vdwg.mxu0
        %v1469 = vpack.c.bf16 %v1347, %v1344
        %v1470 = vpack.c.bf16 %v1355, %v1352
        %v1471 = vpack.c.bf16 %v1363, %v1360
        %v1472 = vpack.c.bf16 %v1371, %v1368
        %v1473 = vpack.c.bf16 %v1379, %v1376
        %v1474 = vpack.c.bf16 %v1387, %v1384
        %v1475 = vpack.c.bf16 %v1395, %v1392
        %v1476 = vpack.c.bf16 %v1403, %v1400
        %v1477 = vpack.c.bf16 %v1411, %v1408
        %v1478 = vpack.c.bf16 %v1419, %v1416
        %v1479 = vpack.c.bf16 %v1427, %v1424
        %v1480 = vpack.c.bf16 %v1435, %v1432
        %v1481 = vpack.c.bf16 %v1443, %v1440
        %v1482 = vpack.c.bf16 %v1451, %v1448
        %v1483 = vpack.c.bf16 %v1459, %v1456
        %v1484 = vpack.c.bf16 %v1464, %v1464
        %v1501 = vunpack.c.l.b16 %v1469
        %v1502 = vunpack.c.h.b16 %v1469
        %v1503 = vunpack.c.l.b16 %v1470
        %v1504 = vunpack.c.h.b16 %v1470
        %v1505 = vunpack.c.l.b16 %v1471
        %v1506 = vunpack.c.h.b16 %v1471
        %v1507 = vunpack.c.l.b16 %v1472
        %v1508 = vunpack.c.h.b16 %v1472
        %v1509 = vunpack.c.l.b16 %v1473
        %v1510 = vunpack.c.h.b16 %v1473
        %v1511 = vunpack.c.l.b16 %v1474
        %v1512 = vunpack.c.h.b16 %v1474
        %v1513 = vunpack.c.l.b16 %v1475
        %v1514 = vunpack.c.h.b16 %v1475
        %v1515 = vunpack.c.l.b16 %v1476
        %v1516 = vunpack.c.h.b16 %v1476
        %v1517 = vunpack.c.l.b16 %v1477
        %v1518 = vunpack.c.h.b16 %v1477
        %v1519 = vunpack.c.l.b16 %v1478
        %v1520 = vunpack.c.h.b16 %v1478
        %v1521 = vunpack.c.l.b16 %v1479
        %v1522 = vunpack.c.h.b16 %v1479
        %v1523 = vunpack.c.l.b16 %v1480
        %v1524 = vunpack.c.h.b16 %v1480
        %v1525 = vunpack.c.l.b16 %v1481
        %v1526 = vunpack.c.h.b16 %v1481
        %v1527 = vunpack.c.l.b16 %v1482
        %v1528 = vunpack.c.h.b16 %v1482
        %v1529 = vunpack.c.l.b16 %v1483
        %v1530 = vunpack.c.h.b16 %v1483
        %v1531 = vunpack.c.l.b16 %v1484
        %v1532 = vpack.c.b16 %v1501, %v1501
        %v1533 = vpack.c.b16 %v1502, %v1502
        %v1534 = vpack.c.b16 %v1503, %v1503
        %v1535 = vpack.c.b16 %v1504, %v1504
        %v1536 = vpack.c.b16 %v1505, %v1505
        %v1537 = vpack.c.b16 %v1506, %v1506
        %v1538 = vpack.c.b16 %v1507, %v1507
        %v1539 = vpack.c.b16 %v1508, %v1508
        %v1540 = vpack.c.b16 %v1509, %v1509
        %v1541 = vpack.c.b16 %v1510, %v1510
        %v1542 = vpack.c.b16 %v1511, %v1511
        %v1543 = vpack.c.b16 %v1512, %v1512
        %v1544 = vpack.c.b16 %v1513, %v1513
        %v1545 = vpack.c.b16 %v1514, %v1514
        %v1546 = vpack.c.b16 %v1515, %v1515
        %v1547 = vpack.c.b16 %v1516, %v1516
        %v1548 = vpack.c.b16 %v1517, %v1517
        %v1549 = vpack.c.b16 %v1518, %v1518
        %v1550 = vpack.c.b16 %v1519, %v1519
        %v1551 = vpack.c.b16 %v1520, %v1520
        %v1552 = vpack.c.b16 %v1521, %v1521
        %v1553 = vpack.c.b16 %v1522, %v1522
        %v1554 = vpack.c.b16 %v1523, %v1523
        %v1555 = vpack.c.b16 %v1524, %v1524
        %v1556 = vpack.c.b16 %v1525, %v1525
        %v1557 = vpack.c.b16 %v1526, %v1526
        %v1558 = vpack.c.b16 %v1527, %v1527
        %v1559 = vpack.c.b16 %v1528, %v1528
        %v1560 = vpack.c.b16 %v1529, %v1529
        %v1561 = vpack.c.b16 %v1530, %v1530
        %v1562 = vpack.c.b16 %v1531, %v1531
        %1594 = vst [vmem:[%s334] sm:$0xf] %v1532
        %1595 = vst [vmem:[%s334 + $0x4] sm:$0xf] %v1533
        %1596 = vst [vmem:[%s334 + $0x8] sm:$0xf] %v1534
        %1597 = vst [vmem:[%s334 + $0xc] sm:$0xf] %v1535
        %1598 = vst [vmem:[%s334 + $0x10] sm:$0xf] %v1536
        %1599 = vst [vmem:[%s334 + $0x14] sm:$0xf] %v1537
        %1600 = vst [vmem:[%s334 + $0x18] sm:$0xf] %v1538
        %1601 = vst [vmem:[%s334 + $0x1c] sm:$0xf] %v1539
        %1602 = vst [vmem:[%s334 + $0x20] sm:$0xf] %v1540
        %1603 = vst [vmem:[%s334 + $0x24] sm:$0xf] %v1541
        %1604 = vst [vmem:[%s334 + $0x28] sm:$0xf] %v1542
        %1605 = vst [vmem:[%s334 + $0x2c] sm:$0xf] %v1543
        %1606 = vst [vmem:[%s334 + $0x30] sm:$0xf] %v1544
        %1607 = vst [vmem:[%s334 + $0x34] sm:$0xf] %v1545
        %1608 = vst [vmem:[%s334 + $0x38] sm:$0xf] %v1546
        %1609 = vst [vmem:[%s334 + $0x3c] sm:$0xf] %v1547
        %1610 = vst [vmem:[%s334 + $0x40] sm:$0xf] %v1548
        %1611 = vst [vmem:[%s334 + $0x44] sm:$0xf] %v1549
        %1612 = vst [vmem:[%s334 + $0x48] sm:$0xf] %v1550
        %1613 = vst [vmem:[%s334 + $0x4c] sm:$0xf] %v1551
        %1614 = vst [vmem:[%s334 + $0x50] sm:$0xf] %v1552
        %1615 = vst [vmem:[%s334 + $0x54] sm:$0xf] %v1553
        %1616 = vst [vmem:[%s334 + $0x58] sm:$0xf] %v1554
        %1617 = vst [vmem:[%s334 + $0x5c] sm:$0xf] %v1555
        %1618 = vst [vmem:[%s334 + $0x60] sm:$0xf] %v1556
        %1619 = vst [vmem:[%s334 + $0x64] sm:$0xf] %v1557
        %1620 = vst [vmem:[%s334 + $0x68] sm:$0xf] %v1558
        %1621 = vst [vmem:[%s334 + $0x6c] sm:$0xf] %v1559
        %1622 = vst [vmem:[%s334 + $0x70] sm:$0xf] %v1560
        %1623 = vst [vmem:[%s334 + $0x74] sm:$0xf] %v1561
        %1624 = vst [vmem:[%s334 + $0x78] sm:$0xf] %v1562
        %s1625 = sand.u32 %s222, 1
        %s1626 = sand.u32 %s222, 1
        %s1627 = smul.addr %s1626, 124
        %s1628 = scalar_lea.vmem [#allocation2], %s1627
        // Predicated region
        $region57: #{sdae_forward.1} parent=55 // pred_check
          %p1629 = pneg %p232
        $region58: #{sdae_forward.1} parent=55 // pred_check_branch
          %1631 = sbr.rel (%p1629) target = $region60
        $region59: #{sdae_forward.1} parent=55 // pred_region
          %s1632 = smul.u32 31, %s20
          %s1633 = ssub.s32 32, %s1632
          %p1634 = scmp.lt.s32.totalorder %s1633, 31
          %s1635 = scalar_select %p1634, %s1633, 31
          %s1636 = smul.u32 64, %s1635
          %p1637 = scmp.ne.s32.totalorder 0, %s1636
          %s1638 = smul.addr %s1632, 4
          %s1639 = scalar_lea.vmem %s9, %s1638
          // Predicated region
          $region61: #{sdae_forward.1} parent=59 // pred_check
            %p1640 = pneg %p1637
          $region62: #{sdae_forward.1} parent=59 // pred_check_branch
            %1642 = sbr.rel (%p1640) target = $region64
          $region63: #{sdae_forward.1} parent=59 // pred_region
            // Predicated region
            $region65: #{sdae_forward.1} parent=63 // pred_check
              _
            $region66: #{sdae_forward.1} parent=63 // pred_check_branch
              %1644 = sbr.rel target = $region68
            $region67: #{sdae_forward.1} parent=63 // pred_region
              // Predicated region
              $region87: #{sdae_forward.1} parent=67 // pred_check
                _
              $region88: #{sdae_forward.1} parent=67 // pred_check_branch
                %1754 = sbr.rel (0) target = $region90
              $region89: #{sdae_forward.1} parent=67 // pred_region
                %s1756 = sdiv.u32.pop %s1635, 31
                %s1757 = srem.u32.pop %s1635, 31
                // While loop
                $region91: #{sdae_forward.1} parent=89 // loop_pre_header
                  _
                $region92: #{sdae_forward.1} parent=89 // loop_header
                  %s1759 = sphi 0, %s1761
                  %p1760 = scmp.ge.s32.totalorder %s1759, %s1756
                  %s1764 = sphi 0, %s1831
                  %s1765 = sphi %s1628, %s1834
                  %s1766 = sphi %s1639, %s1835
                $region93: #{sdae_forward.1} parent=89 // loop_header_branch
                  %1763 = sbr.rel (%p1760) target = $region97
                $region94: #{sdae_forward.1} parent=89 // loop_body
                  %v1767 = vld [vmem:[%s1765] sm:$0xf]
                  %1768 = vst [vmem:[%s1766] sm:$0xf] %v1767
                  %v1769 = vld [vmem:[%s1765 + $0x4] sm:$0xf]
                  %1770 = vst [vmem:[%s1766 + $0x4] sm:$0xf] %v1769
                  %v1771 = vld [vmem:[%s1765 + $0x8] sm:$0xf]
                  %1772 = vst [vmem:[%s1766 + $0x8] sm:$0xf] %v1771
                  %v1773 = vld [vmem:[%s1765 + $0xc] sm:$0xf]
                  %1774 = vst [vmem:[%s1766 + $0xc] sm:$0xf] %v1773
                  %v1775 = vld [vmem:[%s1765 + $0x10] sm:$0xf]
                  %1776 = vst [vmem:[%s1766 + $0x10] sm:$0xf] %v1775
                  %v1777 = vld [vmem:[%s1765 + $0x14] sm:$0xf]
                  %1778 = vst [vmem:[%s1766 + $0x14] sm:$0xf] %v1777
                  %v1779 = vld [vmem:[%s1765 + $0x18] sm:$0xf]
                  %1780 = vst [vmem:[%s1766 + $0x18] sm:$0xf] %v1779
                  %v1781 = vld [vmem:[%s1765 + $0x1c] sm:$0xf]
                  %1782 = vst [vmem:[%s1766 + $0x1c] sm:$0xf] %v1781
                  %v1783 = vld [vmem:[%s1765 + $0x20] sm:$0xf]
                  %1784 = vst [vmem:[%s1766 + $0x20] sm:$0xf] %v1783
                  %v1785 = vld [vmem:[%s1765 + $0x24] sm:$0xf]
                  %1786 = vst [vmem:[%s1766 + $0x24] sm:$0xf] %v1785
                  %v1787 = vld [vmem:[%s1765 + $0x28] sm:$0xf]
                  %1788 = vst [vmem:[%s1766 + $0x28] sm:$0xf] %v1787
                  %v1789 = vld [vmem:[%s1765 + $0x2c] sm:$0xf]
                  %1790 = vst [vmem:[%s1766 + $0x2c] sm:$0xf] %v1789
                  %v1791 = vld [vmem:[%s1765 + $0x30] sm:$0xf]
                  %1792 = vst [vmem:[%s1766 + $0x30] sm:$0xf] %v1791
                  %v1793 = vld [vmem:[%s1765 + $0x34] sm:$0xf]
                  %1794 = vst [vmem:[%s1766 + $0x34] sm:$0xf] %v1793
                  %v1795 = vld [vmem:[%s1765 + $0x38] sm:$0xf]
                  %1796 = vst [vmem:[%s1766 + $0x38] sm:$0xf] %v1795
                  %v1797 = vld [vmem:[%s1765 + $0x3c] sm:$0xf]
                  %1798 = vst [vmem:[%s1766 + $0x3c] sm:$0xf] %v1797
                  %v1799 = vld [vmem:[%s1765 + $0x40] sm:$0xf]
                  %1800 = vst [vmem:[%s1766 + $0x40] sm:$0xf] %v1799
                  %v1801 = vld [vmem:[%s1765 + $0x44] sm:$0xf]
                  %1802 = vst [vmem:[%s1766 + $0x44] sm:$0xf] %v1801
                  %v1803 = vld [vmem:[%s1765 + $0x48] sm:$0xf]
                  %1804 = vst [vmem:[%s1766 + $0x48] sm:$0xf] %v1803
                  %v1805 = vld [vmem:[%s1765 + $0x4c] sm:$0xf]
                  %1806 = vst [vmem:[%s1766 + $0x4c] sm:$0xf] %v1805
                  %v1807 = vld [vmem:[%s1765 + $0x50] sm:$0xf]
                  %1808 = vst [vmem:[%s1766 + $0x50] sm:$0xf] %v1807
                  %v1809 = vld [vmem:[%s1765 + $0x54] sm:$0xf]
                  %1810 = vst [vmem:[%s1766 + $0x54] sm:$0xf] %v1809
                  %v1811 = vld [vmem:[%s1765 + $0x58] sm:$0xf]
                  %1812 = vst [vmem:[%s1766 + $0x58] sm:$0xf] %v1811
                  %v1813 = vld [vmem:[%s1765 + $0x5c] sm:$0xf]
                  %1814 = vst [vmem:[%s1766 + $0x5c] sm:$0xf] %v1813
                  %v1815 = vld [vmem:[%s1765 + $0x60] sm:$0xf]
                  %1816 = vst [vmem:[%s1766 + $0x60] sm:$0xf] %v1815
                  %v1817 = vld [vmem:[%s1765 + $0x64] sm:$0xf]
                  %1818 = vst [vmem:[%s1766 + $0x64] sm:$0xf] %v1817
                  %v1819 = vld [vmem:[%s1765 + $0x68] sm:$0xf]
                  %1820 = vst [vmem:[%s1766 + $0x68] sm:$0xf] %v1819
                  %v1821 = vld [vmem:[%s1765 + $0x6c] sm:$0xf]
                  %1822 = vst [vmem:[%s1766 + $0x6c] sm:$0xf] %v1821
                  %v1823 = vld [vmem:[%s1765 + $0x70] sm:$0xf]
                  %1824 = vst [vmem:[%s1766 + $0x70] sm:$0xf] %v1823
                  %v1825 = vld [vmem:[%s1765 + $0x74] sm:$0xf]
                  %1826 = vst [vmem:[%s1766 + $0x74] sm:$0xf] %v1825
                  %v1827 = vld [vmem:[%s1765 + $0x78] sm:$0xf]
                  %1828 = vst [vmem:[%s1766 + $0x78] sm:$0xf] %v1827
                  %s1829 = sadd.s32 1, %s1764
                  %p1830 = scmp.ge.s32.totalorder %s1829, %s1756
                  %s1831 = scalar_select %p1830, 0, %s1829
                  %s1832 = smul.u32 %s1831, 124
                  %s1833 = smul.u32 %s1831, 124
                  %s1834 = scalar_lea.vmem %s1628, %s1832 [#allocation2]
                  %s1835 = scalar_lea.vmem %s1639, %s1833
                $region95: #{sdae_forward.1} parent=89 // loop_footer
                  %s1761 = sadd.s32 %s1759, 1
                $region96: #{sdae_forward.1} parent=89 // loop_footer_branch
                  %1758 = sbr.rel target = $region92
                $region97: #{sdae_forward.1} parent=89 // loop_exit
                  _
                %s1836 = sdiv.u32.pop %s1635, 31
                %s1837 = srem.u32.pop %s1635, 31
                %s1838 = smul.u32 %s1836, 31
                %s1839 = smul.u32 4, %s1838
                %s1840 = scalar_lea.vmem %s1628, %s1839 [#allocation2]
                %s1841 = smul.u32 4, %s1838
                %s1842 = scalar_lea.vmem %s1639, %s1841
                // While loop
                $region98: #{sdae_forward.1} parent=89 // loop_pre_header
                  _
                $region99: #{sdae_forward.1} parent=89 // loop_header
                  %s1844 = sphi 0, %s1846
                  %p1845 = scmp.ge.s32.totalorder %s1844, %s1837
                  %s1849 = sphi 0, %s1856
                  %s1850 = sphi %s1840, %s1859
                  %s1851 = sphi %s1842, %s1860
                $region100: #{sdae_forward.1} parent=89 // loop_header_branch
                  %1848 = sbr.rel (%p1845) target = $region104
                $region101: #{sdae_forward.1} parent=89 // loop_body
                  %v1852 = vld [vmem:[%s1850] sm:$0xf]
                  %1853 = vst [vmem:[%s1851] sm:$0xf] %v1852
                  %s1854 = sadd.s32 1, %s1849
                  %p1855 = scmp.ge.s32.totalorder %s1854, %s1837
                  %s1856 = scalar_select %p1855, 0, %s1854
                  %s1857 = smul.u32 %s1856, 4
                  %s1858 = smul.u32 %s1856, 4
                  %s1859 = scalar_lea.vmem %s1840, %s1857 [#allocation2]
                  %s1860 = scalar_lea.vmem %s1842, %s1858
                $region102: #{sdae_forward.1} parent=89 // loop_footer
                  %s1846 = sadd.s32 %s1844, 1
                $region103: #{sdae_forward.1} parent=89 // loop_footer_branch
                  %1843 = sbr.rel target = $region99
                $region104: #{sdae_forward.1} parent=89 // loop_exit
                  _
              $region90: #{sdae_forward.1} parent=67 // pred_fallthru
                _
            $region68: #{sdae_forward.1} parent=63 // pred_fallthru
              _
            // Predicated region
            $region69: #{sdae_forward.1} parent=63 // pred_check
              _
            $region70: #{sdae_forward.1} parent=63 // pred_check_branch
              %1646 = sbr.rel (0) target = $region72
            $region71: #{sdae_forward.1} parent=63 // pred_region
              %s1648 = sdiv.u32.pop %s1635, 31
              %s1649 = srem.u32.pop %s1635, 31
              // While loop
              $region73: #{sdae_forward.1} parent=71 // loop_pre_header
                _
              $region74: #{sdae_forward.1} parent=71 // loop_header
                %s1651 = sphi 0, %s1653
                %p1652 = scmp.ge.s32.totalorder %s1651, %s1648
                %s1656 = sphi 0, %s1723
                %s1657 = sphi %s1628, %s1726
                %s1658 = sphi %s1639, %s1727
              $region75: #{sdae_forward.1} parent=71 // loop_header_branch
                %1655 = sbr.rel (%p1652) target = $region79
              $region76: #{sdae_forward.1} parent=71 // loop_body
                %v1659 = vld [vmem:[%s1657] sm:$0xf]
                %1660 = vst [vmem:[%s1658] sm:$0xf] %v1659
                %v1661 = vld [vmem:[%s1657 + $0x4] sm:$0xf]
                %1662 = vst [vmem:[%s1658 + $0x4] sm:$0xf] %v1661
                %v1663 = vld [vmem:[%s1657 + $0x8] sm:$0xf]
                %1664 = vst [vmem:[%s1658 + $0x8] sm:$0xf] %v1663
                %v1665 = vld [vmem:[%s1657 + $0xc] sm:$0xf]
                %1666 = vst [vmem:[%s1658 + $0xc] sm:$0xf] %v1665
                %v1667 = vld [vmem:[%s1657 + $0x10] sm:$0xf]
                %1668 = vst [vmem:[%s1658 + $0x10] sm:$0xf] %v1667
                %v1669 = vld [vmem:[%s1657 + $0x14] sm:$0xf]
                %1670 = vst [vmem:[%s1658 + $0x14] sm:$0xf] %v1669
                %v1671 = vld [vmem:[%s1657 + $0x18] sm:$0xf]
                %1672 = vst [vmem:[%s1658 + $0x18] sm:$0xf] %v1671
                %v1673 = vld [vmem:[%s1657 + $0x1c] sm:$0xf]
                %1674 = vst [vmem:[%s1658 + $0x1c] sm:$0xf] %v1673
                %v1675 = vld [vmem:[%s1657 + $0x20] sm:$0xf]
                %1676 = vst [vmem:[%s1658 + $0x20] sm:$0xf] %v1675
                %v1677 = vld [vmem:[%s1657 + $0x24] sm:$0xf]
                %1678 = vst [vmem:[%s1658 + $0x24] sm:$0xf] %v1677
                %v1679 = vld [vmem:[%s1657 + $0x28] sm:$0xf]
                %1680 = vst [vmem:[%s1658 + $0x28] sm:$0xf] %v1679
                %v1681 = vld [vmem:[%s1657 + $0x2c] sm:$0xf]
                %1682 = vst [vmem:[%s1658 + $0x2c] sm:$0xf] %v1681
                %v1683 = vld [vmem:[%s1657 + $0x30] sm:$0xf]
                %1684 = vst [vmem:[%s1658 + $0x30] sm:$0xf] %v1683
                %v1685 = vld [vmem:[%s1657 + $0x34] sm:$0xf]
                %1686 = vst [vmem:[%s1658 + $0x34] sm:$0xf] %v1685
                %v1687 = vld [vmem:[%s1657 + $0x38] sm:$0xf]
                %1688 = vst [vmem:[%s1658 + $0x38] sm:$0xf] %v1687
                %v1689 = vld [vmem:[%s1657 + $0x3c] sm:$0xf]
                %1690 = vst [vmem:[%s1658 + $0x3c] sm:$0xf] %v1689
                %v1691 = vld [vmem:[%s1657 + $0x40] sm:$0xf]
                %1692 = vst [vmem:[%s1658 + $0x40] sm:$0xf] %v1691
                %v1693 = vld [vmem:[%s1657 + $0x44] sm:$0xf]
                %1694 = vst [vmem:[%s1658 + $0x44] sm:$0xf] %v1693
                %v1695 = vld [vmem:[%s1657 + $0x48] sm:$0xf]
                %1696 = vst [vmem:[%s1658 + $0x48] sm:$0xf] %v1695
                %v1697 = vld [vmem:[%s1657 + $0x4c] sm:$0xf]
                %1698 = vst [vmem:[%s1658 + $0x4c] sm:$0xf] %v1697
                %v1699 = vld [vmem:[%s1657 + $0x50] sm:$0xf]
                %1700 = vst [vmem:[%s1658 + $0x50] sm:$0xf] %v1699
                %v1701 = vld [vmem:[%s1657 + $0x54] sm:$0xf]
                %1702 = vst [vmem:[%s1658 + $0x54] sm:$0xf] %v1701
                %v1703 = vld [vmem:[%s1657 + $0x58] sm:$0xf]
                %1704 = vst [vmem:[%s1658 + $0x58] sm:$0xf] %v1703
                %v1705 = vld [vmem:[%s1657 + $0x5c] sm:$0xf]
                %1706 = vst [vmem:[%s1658 + $0x5c] sm:$0xf] %v1705
                %v1707 = vld [vmem:[%s1657 + $0x60] sm:$0xf]
                %1708 = vst [vmem:[%s1658 + $0x60] sm:$0xf] %v1707
                %v1709 = vld [vmem:[%s1657 + $0x64] sm:$0xf]
                %1710 = vst [vmem:[%s1658 + $0x64] sm:$0xf] %v1709
                %v1711 = vld [vmem:[%s1657 + $0x68] sm:$0xf]
                %1712 = vst [vmem:[%s1658 + $0x68] sm:$0xf] %v1711
                %v1713 = vld [vmem:[%s1657 + $0x6c] sm:$0xf]
                %1714 = vst [vmem:[%s1658 + $0x6c] sm:$0xf] %v1713
                %v1715 = vld [vmem:[%s1657 + $0x70] sm:$0xf]
                %1716 = vst [vmem:[%s1658 + $0x70] sm:$0xf] %v1715
                %v1717 = vld [vmem:[%s1657 + $0x74] sm:$0xf]
                %1718 = vst [vmem:[%s1658 + $0x74] sm:$0xf] %v1717
                %v1719 = vld [vmem:[%s1657 + $0x78] sm:$0xf]
                %1720 = vst [vmem:[%s1658 + $0x78] sm:$0xf] %v1719
                %s1721 = sadd.s32 1, %s1656
                %p1722 = scmp.ge.s32.totalorder %s1721, %s1648
                %s1723 = scalar_select %p1722, 0, %s1721
                %s1724 = smul.u32 %s1723, 124
                %s1725 = smul.u32 %s1723, 124
                %s1726 = scalar_lea.vmem %s1628, %s1724 [#allocation2]
                %s1727 = scalar_lea.vmem %s1639, %s1725
              $region77: #{sdae_forward.1} parent=71 // loop_footer
                %s1653 = sadd.s32 %s1651, 1
              $region78: #{sdae_forward.1} parent=71 // loop_footer_branch
                %1650 = sbr.rel target = $region74
              $region79: #{sdae_forward.1} parent=71 // loop_exit
                _
              %s1728 = sdiv.u32.pop %s1635, 31
              %s1729 = srem.u32.pop %s1635, 31
              %s1730 = smul.u32 %s1728, 31
              %s1731 = smul.u32 4, %s1730
              %s1732 = scalar_lea.vmem %s1628, %s1731 [#allocation2]
              %s1733 = smul.u32 4, %s1730
              %s1734 = scalar_lea.vmem %s1639, %s1733
              // While loop
              $region80: #{sdae_forward.1} parent=71 // loop_pre_header
                _
              $region81: #{sdae_forward.1} parent=71 // loop_header
                %s1736 = sphi 0, %s1738
                %p1737 = scmp.ge.s32.totalorder %s1736, %s1729
                %s1741 = sphi 0, %s1748
                %s1742 = sphi %s1732, %s1751
                %s1743 = sphi %s1734, %s1752
              $region82: #{sdae_forward.1} parent=71 // loop_header_branch
                %1740 = sbr.rel (%p1737) target = $region86
              $region83: #{sdae_forward.1} parent=71 // loop_body
                %v1744 = vld [vmem:[%s1742] sm:$0xf]
                %1745 = vst [vmem:[%s1743] sm:$0xf] %v1744
                %s1746 = sadd.s32 1, %s1741
                %p1747 = scmp.ge.s32.totalorder %s1746, %s1729
                %s1748 = scalar_select %p1747, 0, %s1746
                %s1749 = smul.u32 %s1748, 4
                %s1750 = smul.u32 %s1748, 4
                %s1751 = scalar_lea.vmem %s1732, %s1749 [#allocation2]
                %s1752 = scalar_lea.vmem %s1734, %s1750
              $region84: #{sdae_forward.1} parent=71 // loop_footer
                %s1738 = sadd.s32 %s1736, 1
              $region85: #{sdae_forward.1} parent=71 // loop_footer_branch
                %1735 = sbr.rel target = $region81
              $region86: #{sdae_forward.1} parent=71 // loop_exit
                _
            $region72: #{sdae_forward.1} parent=63 // pred_fallthru
              _
          $region64: #{sdae_forward.1} parent=59 // pred_fallthru
            _
          %1861 = vnop
        $region60: #{sdae_forward.1} parent=55 // pred_fallthru
          _
      $region56: #{sdae_forward.1} parent=5 // pred_fallthru
        _
      %p1862 = scmp.le.s32.totalorder 2, %s15
      // Predicated region
      $region105: #{sdae_forward.1} parent=5 // pred_check
        %p1863 = pneg %p1862
      $region106: #{sdae_forward.1} parent=5 // pred_check_branch
        %1865 = sbr.rel (%p1863) target = $region108
      $region107: #{sdae_forward.1} parent=5 // pred_region
        %s1866 = ssub.s32 %s15, 2
        // Predicated region
        $region109: #{sdae_forward.1} parent=107 // pred_check
          %p1867 = pneg %p238
        $region110: #{sdae_forward.1} parent=107 // pred_check_branch
          %1869 = sbr.rel (%p1867) target = $region112
        $region111: #{sdae_forward.1} parent=107 // pred_region
          %s1870 = sand.u32 %s223, 1
          %s1871 = sand.u32 %s223, 1
          %s1872 = smul.addr %s1871, 124
          %s1873 = scalar_lea.vmem [#allocation2], %s1872
        $region112: #{sdae_forward.1} parent=107 // pred_fallthru
          _
      $region108: #{sdae_forward.1} parent=5 // pred_fallthru
        _
    $region6: #{sdae_forward.1} parent=1 // loop_footer
      %s19 = sadd.s32 1, %s15
    $region7: #{sdae_forward.1} parent=1 // loop_footer_branch
      %14 = sbr.rel target = $region3
    $region8: #{sdae_forward.1} parent=1 // loop_exit
      _

</llo_original>
